<compile_context>
chip_gen: v5e
topology: v5e:2x2
jax: 0.10.0
libtpu: 0.0.40
codegen_flags: <defaults>
</compile_context>

<pallas_src>
import functools

import jax
import jax.numpy as jnp
from jax.experimental import pallas as pl
from jax.experimental.pallas import tpu as pltpu

BN_EPS = 1e-5
GIN_EPS = 0.0          # GINConv eps right after reset_parameters()
LANE = 128
SUBLANE = 8


def _round_up(x, m):
    return ((x + m - 1) // m) * m


def _vmem_budget_bytes():
    """Generation-aware usable-VMEM budget (leaves headroom for Mosaic scratch)."""
    try:
        cap = int(pltpu.get_tpu_info().vmem_capacity_bytes)
    except Exception:            # conservative fallback (v7x-sized VMEM)
        cap = 64 << 20
    cap = max(32 << 20, min(cap, 256 << 20))
    return int(cap * 0.85)       # ~108 MiB on v5e/v6e (128 MiB), ~54 MiB on v7x (64 MiB)


def _vmem_estimate_bytes(n, b_pad, f_pad, h_pad, tile_n, adj_resident):
    """VMEM estimate counting default double-buffering of every pipelined block."""
    n_pad = _round_up(max(n, tile_n), tile_n)
    est = 0
    # constant-index blocks (fetched once, still double-buffered by default)
    est += 2 * b_pad * n_pad * 2                      # pool (bf16)
    est += 2 * (f_pad * h_pad * 2 + h_pad * 4)        # w0 (bf16), b0 (f32)
    if adj_resident:
        est += 2 * n_pad * n_pad * 2                  # adj resident (bf16)
    else:
        est += 2 * tile_n * n_pad * 1                 # adj streamed row block (int8)
    # per-layer weight blocks
    est += 2 * (h_pad * h_pad * 2 + h_pad * 4)        # ws (bf16), bs (f32)
    # streamed x block and output block
    est += 2 * tile_n * f_pad * 2                     # x (bf16)
    est += 2 * b_pad * h_pad * 4                      # z (f32)
    # region-0 scratch (single copy)
    est += n_pad * h_pad * 4                          # lin / h (f32)
    est += n_pad * h_pad * 2                          # h bf16 MXU operand
    est += 2 * h_pad * 4                              # BN sum / sum of squared deviations
    est += 2 << 20                                    # Mosaic internal scratch headroom
    return est, n_pad


# --------------------------------------------------------------------------------------
# Kernel
# --------------------------------------------------------------------------------------
def ocgin_kernel(x_ref, adj_ref, pool_ref, w0_ref, b0_ref, ws_ref, bs_ref,   # inputs
                 z_ref,                                                       # output
                 lin_ref, hb_ref, sum_ref, sq_ref,                            # scratch
                 *, tile_n, n_valid, n_pad, adj_resident):
    l = pl.program_id(0)                 # layer index   (outer, sequential)
    t = pl.program_id(1)                 # node-row tile (inner, cross-tile reduction)
    n_tiles = pl.num_programs(1)
    start = pl.multiple_of(t * tile_n, tile_n)

    row = start + jax.lax.broadcasted_iota(jnp.int32, (tile_n, 1), 0)
    row_ok = row < n_valid               # padded node rows are excluded from BN stats

    @pl.when(t == 0)
    def _init_stats():
        sum_ref[...] = jnp.zeros_like(sum_ref)

    def _commit(lin):
        # Zero padded rows, store the pre-BN activations, and fold the BN sum
        # accumulation into the in-register value (no store->load round trip).
        lin = jnp.where(row_ok, lin, 0.0)
        lin_ref[pl.ds(start, tile_n), :] = lin
        sum_ref[...] += jnp.sum(lin, axis=0, keepdims=True)

    # ---- per-tile pre-BN linear (bf16 MXU operands, f32 accumulation) -------------------
    @pl.when(l == 0)
    def _layer0():
        lin = jnp.dot(x_ref[...], w0_ref[...],
                      preferred_element_type=jnp.float32) + b0_ref[...]
        _commit(lin)

    @pl.when(l > 0)
    def _gin_layer():
        if adj_resident:
            a_tile = adj_ref[pl.ds(start, tile_n), :]        # bf16, whole adj in VMEM
        else:
            a_tile = adj_ref[...].astype(jnp.bfloat16)       # int8 HBM stream -> bf16
        agg = (1.0 + GIN_EPS) * lin_ref[pl.ds(start, tile_n), :] + jnp.dot(
            a_tile, hb_ref[...], preferred_element_type=jnp.float32)
        lin = jnp.dot(agg.astype(jnp.bfloat16), ws_ref[0],
                      preferred_element_type=jnp.float32) + bs_ref[0]
        _commit(lin)

    # ---- finalize on the last tile: BN + ReLU, pool, stage h for the next layer ---------
    @pl.when(t == n_tiles - 1)
    def _finalize():
        inv_n = jnp.float32(1.0 / n_valid)
        mean = sum_ref[...] * inv_n
        n_chunks = n_pad // tile_n

        # Two-pass variance E[(x-mean)^2] over the resident lin buffer (avoids the
        # E[x^2]-E[x]^2 cancellation of the single-pass formulation).
        sq_ref[...] = jnp.zeros_like(sq_ref)

        def _var_body(i, carry):
            off = pl.multiple_of(i * tile_n, tile_n)
            r = off + jax.lax.broadcasted_iota(jnp.int32, (tile_n, 1), 0)
            d = jnp.where(r < n_valid, lin_ref[pl.ds(off, tile_n), :] - mean, 0.0)
            sq_ref[...] += jnp.sum(d * d, axis=0, keepdims=True)
            return carry

        jax.lax.fori_loop(0, n_chunks, _var_body, 0)
        inv_std = jax.lax.rsqrt(sq_ref[...] * inv_n + BN_EPS)

        # BN + ReLU applied chunk-wise, written straight through the refs:
        # lin_ref becomes the f32 post-BN h of this layer (aliased, no separate h_ref),
        # hb_ref its bf16 MXU copy for the next layer's adj@h and the pooled matmul.
        def _norm_body(i, carry):
            off = pl.multiple_of(i * tile_n, tile_n)
            r = off + jax.lax.broadcasted_iota(jnp.int32, (tile_n, 1), 0)
            hn = jnp.maximum((lin_ref[pl.ds(off, tile_n), :] - mean) * inv_std, 0.0)
            hn = jnp.where(r < n_valid, hn, 0.0)
            lin_ref[pl.ds(off, tile_n), :] = hn
            hb_ref[pl.ds(off, tile_n), :] = hn.astype(jnp.bfloat16)
            return carry

        jax.lax.fori_loop(0, n_chunks, _norm_body, 0)

        # global add pool for this layer: one lane-dense (b_pad, h_pad) slab, bf16 MXU.
        z_ref[0, :, :] = jnp.dot(pool_ref[...], hb_ref[...],
                                 preferred_element_type=jnp.float32)


# --------------------------------------------------------------------------------------
# Wrapper
# --------------------------------------------------------------------------------------
def ocgin_forward(x, adj, pool, params, *, num_layers, hidden_dim,
                  tile_n=None, force_streamed_adj=False):
    assert num_layers >= 1
    n, f = x.shape
    b = pool.shape[0]

    f_pad = _round_up(f, LANE)
    h_pad = _round_up(hidden_dim, LANE)
    b_pad = _round_up(b, SUBLANE)

    # ---- generation-aware VMEM budget drives both tile size and adj residency ----------
    budget = _vmem_budget_bytes()
    max_tile = _round_up(max(n, 1), LANE)
    if tile_n is not None:
        candidates = [max(LANE, _round_up(min(tile_n, max_tile), LANE))]
    else:
        candidates = sorted({max(LANE, min(c, max_tile)) for c in (512, 256, 128)},
                            reverse=True)

    chosen = None
    for adj_resident in ([False] if force_streamed_adj else [True, False]):
        for cand in candidates:
            est, n_pad_c = _vmem_estimate_bytes(n, b_pad, f_pad, h_pad, cand, adj_resident)
            if est <= budget:
                chosen = (cand, adj_resident, n_pad_c)
                break
        if chosen is not None:
            break
    if chosen is None:                  # last resort: smallest tile, streamed int8 adj
        cand = min(candidates)
        chosen = (cand, False, _round_up(max(n, cand), cand))
    tile_n, adj_resident, n_pad = chosen
    n_tiles = n_pad // tile_n

    # ---- zero-pad inputs / parameters to lane-aligned shapes ---------------------------
    xp = jnp.zeros((n_pad, f_pad), jnp.bfloat16).at[:n, :f].set(x.astype(jnp.bfloat16))
    adj_dtype = jnp.bfloat16 if adj_resident else jnp.int8     # 0/1 exact in both
    adjp = jnp.zeros((n_pad, n_pad), adj_dtype).at[:n, :n].set(adj.astype(adj_dtype))
    poolp = jnp.zeros((b_pad, n_pad), jnp.bfloat16).at[:b, :n].set(
        pool.astype(jnp.bfloat16))

    w0 = jnp.zeros((f_pad, h_pad), jnp.bfloat16).at[:f, :hidden_dim].set(
        params["w0"].astype(jnp.bfloat16))
    b0 = jnp.zeros((1, h_pad), jnp.float32).at[:, :hidden_dim].set(params["b0"])
    n_hidden = max(num_layers - 1, 1)
    ws = jnp.zeros((n_hidden, h_pad, h_pad), jnp.bfloat16)
    bs = jnp.zeros((n_hidden, 1, h_pad), jnp.float32)
    if num_layers > 1:
        ws = ws.at[:, :hidden_dim, :hidden_dim].set(params["ws"].astype(jnp.bfloat16))
        bs = bs.at[:, :, :hidden_dim].set(params["bs"])

    # ---- BlockSpecs --------------------------------------------------------------------
    if adj_resident:
        # Whole-array block with a constant index: fetched once, resident across the grid.
        # TODO(synk): pipeline_mode=pl.Buffered(1) would single-buffer this constant block
        # and roughly double the resident-N threshold; kept default-buffered for safety.
        adj_spec = pl.BlockSpec((n_pad, n_pad), lambda l, t: (0, 0))
    else:
        # int8 row blocks; layer 0 never reads adj -> constant block index skips its DMA.
        adj_spec = pl.BlockSpec((tile_n, n_pad),
                                lambda l, t: (jnp.where(l == 0, 0, t), 0))

    in_specs = [
        # x only read at layer 0: constant block index for l > 0 skips its re-DMA.
        pl.BlockSpec((tile_n, f_pad), lambda l, t: (jnp.where(l == 0, t, 0), 0)),
        adj_spec,
        pl.BlockSpec((b_pad, n_pad), lambda l, t: (0, 0)),        # pool (resident, bf16)
        pl.BlockSpec((f_pad, h_pad), lambda l, t: (0, 0)),        # w0   (resident, bf16)
        pl.BlockSpec((1, h_pad), lambda l, t: (0, 0)),            # b0   (resident, f32)
        pl.BlockSpec((1, h_pad, h_pad),
                     lambda l, t: (jnp.maximum(l - 1, 0), 0, 0)),  # ws[l-1] (bf16)
        pl.BlockSpec((1, 1, h_pad),
                     lambda l, t: (jnp.maximum(l - 1, 0), 0, 0)),  # bs[l-1] (f32)
    ]

    kernel = functools.partial(ocgin_kernel, tile_n=tile_n, n_valid=n,
                               n_pad=n_pad, adj_resident=adj_resident)

    z_pal = pl.pallas_call(
        kernel,
        out_shape=jax.ShapeDtypeStruct((num_layers, b_pad, h_pad), jnp.float32),
        grid_spec=pltpu.PrefetchScalarGridSpec(
            num_scalar_prefetch=0,
            grid=(num_layers, n_tiles),
            in_specs=in_specs,
            out_specs=pl.BlockSpec((1, b_pad, h_pad), lambda l, t: (l, 0, 0)),
            scratch_shapes=[
                pltpu.VMEM((n_pad, h_pad), jnp.float32),    # lin / post-BN h (f32, aliased)
                pltpu.VMEM((n_pad, h_pad), jnp.bfloat16),   # h bf16 MXU operand
                pltpu.VMEM((1, h_pad), jnp.float32),        # BN sum
                pltpu.VMEM((1, h_pad), jnp.float32),        # BN sum of squared deviations
            ],
        ),
        # TODO(synk): on v7x the node-tile axis could be split across the two TensorCores
        # (per-core BN partial sums + core_barrier combine); kept sequential for safety.
        compiler_params=pltpu.CompilerParams(
            dimension_semantics=("arbitrary", "arbitrary"),
            vmem_limit_bytes=budget),
    )(xp, adjp, poolp, w0, b0, ws, bs)

    # (L, B_pad, H_pad) lane-dense slab -> (B, L*H) outside the kernel.
    z = z_pal[:, :b, :hidden_dim].transpose(1, 0, 2).reshape(b, num_layers * hidden_dim)
    center = jnp.zeros((1, num_layers * hidden_dim), jnp.float32)   # OCGIN.center
    return z, center


# --------------------------------------------------------------------------------------
# Pure-JAX reference (f32 end-to-end) for the correctness check
# --------------------------------------------------------------------------------------
def _bn_relu(h):
    mean = jnp.mean(h, axis=0, keepdims=True)
    var = jnp.mean((h - mean) ** 2, axis=0, keepdims=True)
    return jnp.maximum((h - mean) * jax.lax.rsqrt(var + BN_EPS), 0.0)


def ocgin_reference(x, adj, pool, params, *, num_layers, hidden_dim):
    h = x @ params["w0"] + params["b0"]
    h = _bn_relu(h)
    outs = [pool @ h]
    for l in range(1, num_layers):
        agg = (1.0 + GIN_EPS) * h + adj @ h
        h = agg @ params["ws"][l - 1] + params["bs"][l - 1]
        h = _bn_relu(h)
        outs.append(pool @ h)
    return jnp.concatenate(outs, axis=1)


def init_params(key, dim_features, hidden_dim, num_layers):
    k0, k1, k2, k3 = jax.random.split(key, 4)
    return {
        "w0": 0.1 * jax.random.normal(k0, (dim_features, hidden_dim), jnp.float32),
        "b0": 0.1 * jax.random.normal(k1, (1, hidden_dim), jnp.float32),
        "ws": 0.1 * jax.random.normal(k2, (max(num_layers - 1, 0), hidden_dim, hidden_dim),
                                      jnp.float32),
        "bs": 0.1 * jax.random.normal(k3, (max(num_layers - 1, 0), 1, hidden_dim),
                                      jnp.float32),
    }


if __name__ == "__main__":
    # Small deterministic synthetic graph batch (2 tiles of 128 node rows -> real grid).
    B, N, F, H, L = 2, 256, 8, 32, 3   # graphs, nodes, feat dim, hidden_dim, num_layers

    key = jax.random.PRNGKey(0)
    kx, ka, kp = jax.random.split(key, 3)

    x = jax.random.normal(kx, (N, F), jnp.float32)

    # Deterministic symmetric 0/1 adjacency with zero diagonal.
    rnd = jax.random.uniform(ka, (N, N))
    adj = (rnd + rnd.T > 1.0).astype(jnp.float32)
    adj = adj * (1.0 - jnp.eye(N, dtype=jnp.float32))

    # First half of the nodes -> graph 0, second half -> graph 1.
    batch_idx = jnp.repeat(jnp.arange(B), N // B)
    pool = jax.nn.one_hot(batch_idx, B, dtype=jnp.float32).T   # (B, N)

    params = init_params(kp, F, H, L)
    z_ref = ocgin_reference(x, adj, pool, params, num_layers=L, hidden_dim=H)

    # Preferred path: adj resident in VMEM (bf16).
    z, center = ocgin_forward(x, adj, pool, params,
                              num_layers=L, hidden_dim=H, tile_n=128)
    z = jax.block_until_ready(z)
    center = jax.block_until_ready(center)
    assert z.shape == (B, H * L) and center.shape == (1, H * L)
    # bf16 MXU operands (adj / h / weights / pool) -> loose tolerance vs f32 reference.
    assert jnp.allclose(z, z_ref, atol=0.5, rtol=5e-2), "resident-adj mismatch vs reference"

    # Fallback path: adj streamed from HBM as int8 row blocks, cast to bf16 in-kernel.
    z_s, _ = ocgin_forward(x, adj, pool, params, num_layers=L, hidden_dim=H,
                           tile_n=128, force_streamed_adj=True)
    z_s = jax.block_until_ready(z_s)
    assert jnp.allclose(z_s, z_ref, atol=0.5, rtol=5e-2), "streamed-adj mismatch vs reference"

    print("KERNEL_OK")
</pallas_src>

<mosaic_0001>
module attributes {stable_mosaic.version = 11 : i64} {
  func.func @ocgin_kernel(%arg0: i32, %arg1: i32, %arg2: memref<128x128xbf16, #tpu.memory_space<vmem>>, %arg3: memref<256x256xbf16, #tpu.memory_space<vmem>>, %arg4: memref<8x256xbf16, #tpu.memory_space<vmem>>, %arg5: memref<128x128xbf16, #tpu.memory_space<vmem>>, %arg6: memref<1x128xf32, #tpu.memory_space<vmem>>, %arg7: memref<1x128x128xbf16, #tpu.memory_space<vmem>>, %arg8: memref<1x1x128xf32, #tpu.memory_space<vmem>>, %arg9: memref<1x8x128xf32, #tpu.memory_space<vmem>>, %arg10: memref<256x128xf32, #tpu.memory_space<vmem>>, %arg11: memref<256x128xbf16, #tpu.memory_space<vmem>>, %arg12: memref<1x128xf32, #tpu.memory_space<vmem>>, %arg13: memref<1x128xf32, #tpu.memory_space<vmem>>) attributes {dimension_semantics = [#tpu.dimension_semantics<arbitrary>, #tpu.dimension_semantics<arbitrary>], iteration_bounds = array<i64: 3, 2>, scalar_prefetch = 0 : i64, scratch_operands = 4 : i64, tpu.core_type = #tpu.core_type<tc>, window_params = [{transform_indices = @transform_0, window_bounds = array<i64: 128, 128>}, {pipeline_mode = #tpu.pipeline_mode<synchronous>, transform_indices = @transform_1, window_bounds = array<i64: 256, 256>}, {pipeline_mode = #tpu.pipeline_mode<synchronous>, transform_indices = @transform_2, window_bounds = array<i64: 8, 256>}, {pipeline_mode = #tpu.pipeline_mode<synchronous>, transform_indices = @transform_3, window_bounds = array<i64: 128, 128>}, {pipeline_mode = #tpu.pipeline_mode<synchronous>, transform_indices = @transform_4, window_bounds = array<i64: 1, 128>}, {transform_indices = @transform_5, window_bounds = array<i64: 1, 128, 128>}, {transform_indices = @transform_6, window_bounds = array<i64: 1, 1, 128>}, {transform_indices = @transform_7, window_bounds = array<i64: 1, 8, 128>}]} {
    %c128_i32 = arith.constant 128 : i32
    %0 = arith.muli %arg1, %c128_i32 : i32
    %1 = tpu.assume_multiple %0, 128 : i32
    %2 = tpu.iota {dimensions = array<i32: 0>} : vector<128x1xi32>
    %3 = vector.broadcast %1 : i32 to vector<128x1xi32>
    %4 = arith.addi %3, %2 : vector<128x1xi32>
    %c256_i32 = arith.constant 256 : i32
    %5 = vector.broadcast %c256_i32 : i32 to vector<128x1xi32>
    %6 = arith.cmpi slt, %4, %5 : vector<128x1xi32>
    %c0_i32 = arith.constant 0 : i32
    %7 = arith.cmpi eq, %arg1, %c0_i32 : i32
    %8 = arith.extui %7 : i1 to i32
    %c0_i32_0 = arith.constant 0 : i32
    %9 = arith.cmpi ne, %8, %c0_i32_0 : i32
    scf.if %9 {
      %cst = arith.constant 0.000000e+00 : f32
      %19 = vector.broadcast %cst : f32 to vector<1x128xf32>
      %c0 = arith.constant 0 : index
      %c0_6 = arith.constant 0 : index
      %20 = vector.load %arg12[%c0, %c0_6] : memref<1x128xf32, #tpu.memory_space<vmem>>, vector<1x128xf32>
      tpu.vector_store %arg12[%c0, %c0_6], %19 {strides = array<i32>} : memref<1x128xf32, #tpu.memory_space<vmem>>, vector<1x128xf32>,
    } else {
    }
    %c0_i32_1 = arith.constant 0 : i32
    %10 = arith.cmpi eq, %arg0, %c0_i32_1 : i32
    %11 = arith.extui %10 : i1 to i32
    %c0_i32_2 = arith.constant 0 : i32
    %12 = arith.cmpi ne, %11, %c0_i32_2 : i32
    scf.if %12 {
      %c0 = arith.constant 0 : index
      %c0_6 = arith.constant 0 : index
      %19 = vector.load %arg2[%c0, %c0_6] : memref<128x128xbf16, #tpu.memory_space<vmem>>, vector<128x128xbf16>
      %c0_7 = arith.constant 0 : index
      %c0_8 = arith.constant 0 : index
      %20 = vector.load %arg5[%c0_7, %c0_8] : memref<128x128xbf16, #tpu.memory_space<vmem>>, vector<128x128xbf16>
      %cst = arith.constant dense<0.000000e+00> : vector<128x128xf32>
      %21 = tpu.matmul %19, %20, %cst {dimension_numbers = #tpu.dot_dimension_numbers<[1], [0], [0], [1], [0, 0, 1, 1], [], []>} : vector<128x128xbf16>, vector<128x128xbf16>, vector<128x128xf32> -> vector<128x128xf32>
      %c0_9 = arith.constant 0 : index
      %c0_10 = arith.constant 0 : index
      %22 = vector.load %arg6[%c0_9, %c0_10] : memref<1x128xf32, #tpu.memory_space<vmem>>, vector<1x128xf32>
      %23 = vector.broadcast %22 : vector<1x128xf32> to vector<128x128xf32>
      %24 = arith.addf %21, %23 : vector<128x128xf32>
      %cst_11 = arith.constant 0.000000e+00 : f32
      %25 = vector.shape_cast %6 : vector<128x1xi1> to vector<128x1xi1>
      %26 = vector.broadcast %25 : vector<128x1xi1> to vector<128x128xi1>
      %27 = vector.broadcast %cst_11 : f32 to vector<128x128xf32>
      %28 = arith.select %26, %24, %27 : vector<128x128xi1>, vector<128x128xf32>
      %29 = arith.index_cast %1 : i32 to index
      %c0_12 = arith.constant 0 : index
      %30 = vector.load %arg10[%29, %c0_12] : memref<256x128xf32, #tpu.memory_space<vmem>>, vector<128x128xf32>
      tpu.vector_store %arg10[%29, %c0_12], %28 {strides = array<i32>} : memref<256x128xf32, #tpu.memory_space<vmem>>, vector<128x128xf32>,
      %c0_13 = arith.constant 0 : index
      %c0_14 = arith.constant 0 : index
      %31 = vector.load %arg12[%c0_13, %c0_14] : memref<1x128xf32, #tpu.memory_space<vmem>>, vector<1x128xf32>
      %cst_15 = arith.constant dense<0.000000e+00> : vector<128xf32>
      %32 = vector.multi_reduction <add>, %28, %cst_15 [0] : vector<128x128xf32> to vector<128xf32>
      %33 = vector.shape_cast %32 : vector<128xf32> to vector<1x128xf32>
      %34 = arith.addf %31, %33 : vector<1x128xf32>
      %c0_16 = arith.constant 0 : index
      %c0_17 = arith.constant 0 : index
      %35 = vector.load %arg12[%c0_16, %c0_17] : memref<1x128xf32, #tpu.memory_space<vmem>>, vector<1x128xf32>
      tpu.vector_store %arg12[%c0_16, %c0_17], %34 {strides = array<i32>} : memref<1x128xf32, #tpu.memory_space<vmem>>, vector<1x128xf32>,
    } else {
    }
    %c0_i32_3 = arith.constant 0 : i32
    %13 = arith.cmpi sgt, %arg0, %c0_i32_3 : i32
    %14 = arith.extui %13 : i1 to i32
    %c0_i32_4 = arith.constant 0 : i32
    %15 = arith.cmpi ne, %14, %c0_i32_4 : i32
    scf.if %15 {
      %19 = arith.index_cast %1 : i32 to index
      %c0 = arith.constant 0 : index
      %20 = vector.load %arg3[%19, %c0] : memref<256x256xbf16, #tpu.memory_space<vmem>>, vector<128x256xbf16>
      %21 = arith.index_cast %1 : i32 to index
      %c0_6 = arith.constant 0 : index
      %22 = vector.load %arg10[%21, %c0_6] : memref<256x128xf32, #tpu.memory_space<vmem>>, vector<128x128xf32>
      %cst = arith.constant 1.000000e+00 : f32
      %23 = vector.broadcast %cst : f32 to vector<128x128xf32>
      %24 = arith.mulf %23, %22 : vector<128x128xf32>
      %c0_7 = arith.constant 0 : index
      %c0_8 = arith.constant 0 : index
      %25 = vector.load %arg11[%c0_7, %c0_8] : memref<256x128xbf16, #tpu.memory_space<vmem>>, vector<256x128xbf16>
      %cst_9 = arith.constant dense<0.000000e+00> : vector<128x128xf32>
      %26 = tpu.matmul %20, %25, %cst_9 {dimension_numbers = #tpu.dot_dimension_numbers<[1], [0], [0], [1], [0, 0, 1, 1], [], []>} : vector<128x256xbf16>, vector<256x128xbf16>, vector<128x128xf32> -> vector<128x128xf32>
      %27 = arith.addf %24, %26 : vector<128x128xf32>
      %28 = arith.truncf %27 : vector<128x128xf32> to vector<128x128xbf16>
      %c0_10 = arith.constant 0 : index
      %c0_11 = arith.constant 0 : index
      %c0_12 = arith.constant 0 : index
      %29 = vector.load %arg7[%c0_10, %c0_11, %c0_12] : memref<1x128x128xbf16, #tpu.memory_space<vmem>>, vector<1x128x128xbf16>
      %30 = vector.shape_cast %29 : vector<1x128x128xbf16> to vector<128x128xbf16>
      %cst_13 = arith.constant dense<0.000000e+00> : vector<128x128xf32>
      %31 = tpu.matmul %28, %30, %cst_13 {dimension_numbers = #tpu.dot_dimension_numbers<[1], [0], [0], [1], [0, 0, 1, 1], [], []>} : vector<128x128xbf16>, vector<128x128xbf16>, vector<128x128xf32> -> vector<128x128xf32>
      %c0_14 = arith.constant 0 : index
      %c0_15 = arith.constant 0 : index
      %c0_16 = arith.constant 0 : index
      %32 = vector.load %arg8[%c0_14, %c0_15, %c0_16] : memref<1x1x128xf32, #tpu.memory_space<vmem>>, vector<1x1x128xf32>
      %33 = vector.shape_cast %32 : vector<1x1x128xf32> to vector<1x128xf32>
      %34 = vector.broadcast %33 : vector<1x128xf32> to vector<128x128xf32>
      %35 = arith.addf %31, %34 : vector<128x128xf32>
      %cst_17 = arith.constant 0.000000e+00 : f32
      %36 = vector.shape_cast %6 : vector<128x1xi1> to vector<128x1xi1>
      %37 = vector.broadcast %36 : vector<128x1xi1> to vector<128x128xi1>
      %38 = vector.broadcast %cst_17 : f32 to vector<128x128xf32>
      %39 = arith.select %37, %35, %38 : vector<128x128xi1>, vector<128x128xf32>
      %40 = arith.index_cast %1 : i32 to index
      %c0_18 = arith.constant 0 : index
      %41 = vector.load %arg10[%40, %c0_18] : memref<256x128xf32, #tpu.memory_space<vmem>>, vector<128x128xf32>
      tpu.vector_store %arg10[%40, %c0_18], %39 {strides = array<i32>} : memref<256x128xf32, #tpu.memory_space<vmem>>, vector<128x128xf32>,
      %c0_19 = arith.constant 0 : index
      %c0_20 = arith.constant 0 : index
      %42 = vector.load %arg12[%c0_19, %c0_20] : memref<1x128xf32, #tpu.memory_space<vmem>>, vector<1x128xf32>
      %cst_21 = arith.constant dense<0.000000e+00> : vector<128xf32>
      %43 = vector.multi_reduction <add>, %39, %cst_21 [0] : vector<128x128xf32> to vector<128xf32>
      %44 = vector.shape_cast %43 : vector<128xf32> to vector<1x128xf32>
      %45 = arith.addf %42, %44 : vector<1x128xf32>
      %c0_22 = arith.constant 0 : index
      %c0_23 = arith.constant 0 : index
      %46 = vector.load %arg12[%c0_22, %c0_23] : memref<1x128xf32, #tpu.memory_space<vmem>>, vector<1x128xf32>
      tpu.vector_store %arg12[%c0_22, %c0_23], %45 {strides = array<i32>} : memref<1x128xf32, #tpu.memory_space<vmem>>, vector<1x128xf32>,
    } else {
    }
    %c1_i32 = arith.constant 1 : i32
    %16 = arith.cmpi eq, %arg1, %c1_i32 : i32
    %17 = arith.extui %16 : i1 to i32
    %c0_i32_5 = arith.constant 0 : i32
    %18 = arith.cmpi ne, %17, %c0_i32_5 : i32
    scf.if %18 {
      %c0 = arith.constant 0 : index
      %c0_6 = arith.constant 0 : index
      %19 = vector.load %arg12[%c0, %c0_6] : memref<1x128xf32, #tpu.memory_space<vmem>>, vector<1x128xf32>
      %cst = arith.constant 3.906250e-03 : f32
      %20 = vector.broadcast %cst : f32 to vector<1x128xf32>
      %21 = arith.mulf %19, %20 : vector<1x128xf32>
      %cst_7 = arith.constant 0.000000e+00 : f32
      %22 = vector.broadcast %cst_7 : f32 to vector<1x128xf32>
      %c0_8 = arith.constant 0 : index
      %c0_9 = arith.constant 0 : index
      %23 = vector.load %arg13[%c0_8, %c0_9] : memref<1x128xf32, #tpu.memory_space<vmem>>, vector<1x128xf32>
      tpu.vector_store %arg13[%c0_8, %c0_9], %22 {strides = array<i32>} : memref<1x128xf32, #tpu.memory_space<vmem>>, vector<1x128xf32>,
      %c0_i32_10 = arith.constant 0 : i32
      %c2_i32 = arith.constant 2 : i32
      %24 = arith.addi %c0_i32_10, %c2_i32 : i32
      %c1_i32_11 = arith.constant 1 : i32
      scf.for %arg14 = %c0_i32_10 to %24 step %c1_i32_11  : i32 {
        %c128_i32_29 = arith.constant 128 : i32
        %38 = arith.muli %arg14, %c128_i32_29 : i32
        %39 = tpu.assume_multiple %38, 128 : i32
        %40 = tpu.iota {dimensions = array<i32: 0>} : vector<128x1xi32>
        %41 = vector.broadcast %39 : i32 to vector<128x1xi32>
        %42 = arith.addi %41, %40 : vector<128x1xi32>
        %c256_i32_30 = arith.constant 256 : i32
        %43 = vector.broadcast %c256_i32_30 : i32 to vector<128x1xi32>
        %44 = arith.cmpi slt, %42, %43 : vector<128x1xi32>
        %45 = arith.index_cast %39 : i32 to index
        %c0_31 = arith.constant 0 : index
        %46 = vector.load %arg10[%45, %c0_31] : memref<256x128xf32, #tpu.memory_space<vmem>>, vector<128x128xf32>
        %47 = vector.broadcast %21 : vector<1x128xf32> to vector<128x128xf32>
        %48 = arith.subf %46, %47 : vector<128x128xf32>
        %cst_32 = arith.constant 0.000000e+00 : f32
        %49 = vector.shape_cast %44 : vector<128x1xi1> to vector<128x1xi1>
        %50 = vector.broadcast %49 : vector<128x1xi1> to vector<128x128xi1>
        %51 = vector.broadcast %cst_32 : f32 to vector<128x128xf32>
        %52 = arith.select %50, %48, %51 : vector<128x128xi1>, vector<128x128xf32>
        %c0_33 = arith.constant 0 : index
        %c0_34 = arith.constant 0 : index
        %53 = vector.load %arg13[%c0_33, %c0_34] : memref<1x128xf32, #tpu.memory_space<vmem>>, vector<1x128xf32>
        %54 = arith.mulf %52, %52 : vector<128x128xf32>
        %cst_35 = arith.constant dense<0.000000e+00> : vector<128xf32>
        %55 = vector.multi_reduction <add>, %54, %cst_35 [0] : vector<128x128xf32> to vector<128xf32>
        %56 = vector.shape_cast %55 : vector<128xf32> to vector<1x128xf32>
        %57 = arith.addf %53, %56 : vector<1x128xf32>
        %c0_36 = arith.constant 0 : index
        %c0_37 = arith.constant 0 : index
        %58 = vector.load %arg13[%c0_36, %c0_37] : memref<1x128xf32, #tpu.memory_space<vmem>>, vector<1x128xf32>
        tpu.vector_store %arg13[%c0_36, %c0_37], %57 {strides = array<i32>} : memref<1x128xf32, #tpu.memory_space<vmem>>, vector<1x128xf32>,
      }
      %c2_i32_12 = arith.constant 2 : i32
      %c0_13 = arith.constant 0 : index
      %c0_14 = arith.constant 0 : index
      %25 = vector.load %arg13[%c0_13, %c0_14] : memref<1x128xf32, #tpu.memory_space<vmem>>, vector<1x128xf32>
      %cst_15 = arith.constant 3.906250e-03 : f32
      %26 = vector.broadcast %cst_15 : f32 to vector<1x128xf32>
      %27 = arith.mulf %25, %26 : vector<1x128xf32>
      %cst_16 = arith.constant 9.99999974E-6 : f32
      %28 = vector.broadcast %cst_16 : f32 to vector<1x128xf32>
      %29 = arith.addf %27, %28 : vector<1x128xf32>
      %30 = math.rsqrt %29 : vector<1x128xf32>
      %c0_i32_17 = arith.constant 0 : i32
      %c2_i32_18 = arith.constant 2 : i32
      %31 = arith.addi %c0_i32_17, %c2_i32_18 : i32
      %c1_i32_19 = arith.constant 1 : i32
      scf.for %arg14 = %c0_i32_17 to %31 step %c1_i32_19  : i32 {
        %c128_i32_29 = arith.constant 128 : i32
        %38 = arith.muli %arg14, %c128_i32_29 : i32
        %39 = tpu.assume_multiple %38, 128 : i32
        %40 = tpu.iota {dimensions = array<i32: 0>} : vector<128x1xi32>
        %41 = vector.broadcast %39 : i32 to vector<128x1xi32>
        %42 = arith.addi %41, %40 : vector<128x1xi32>
        %43 = arith.index_cast %39 : i32 to index
        %c0_30 = arith.constant 0 : index
        %44 = vector.load %arg10[%43, %c0_30] : memref<256x128xf32, #tpu.memory_space<vmem>>, vector<128x128xf32>
        %45 = vector.broadcast %21 : vector<1x128xf32> to vector<128x128xf32>
        %46 = arith.subf %44, %45 : vector<128x128xf32>
        %47 = vector.broadcast %30 : vector<1x128xf32> to vector<128x128xf32>
        %48 = arith.mulf %46, %47 : vector<128x128xf32>
        %cst_31 = arith.constant 0.000000e+00 : f32
        %49 = vector.broadcast %cst_31 : f32 to vector<128x128xf32>
        %50 = arith.maximumf %48, %49 : vector<128x128xf32>
        %c256_i32_32 = arith.constant 256 : i32
        %51 = vector.broadcast %c256_i32_32 : i32 to vector<128x1xi32>
        %52 = arith.cmpi slt, %42, %51 : vector<128x1xi32>
        %cst_33 = arith.constant 0.000000e+00 : f32
        %53 = vector.shape_cast %52 : vector<128x1xi1> to vector<128x1xi1>
        %54 = vector.broadcast %53 : vector<128x1xi1> to vector<128x128xi1>
        %55 = vector.broadcast %cst_33 : f32 to vector<128x128xf32>
        %56 = arith.select %54, %50, %55 : vector<128x128xi1>, vector<128x128xf32>
        %57 = arith.index_cast %39 : i32 to index
        %c0_34 = arith.constant 0 : index
        %58 = vector.load %arg10[%57, %c0_34] : memref<256x128xf32, #tpu.memory_space<vmem>>, vector<128x128xf32>
        tpu.vector_store %arg10[%57, %c0_34], %56 {strides = array<i32>} : memref<256x128xf32, #tpu.memory_space<vmem>>, vector<128x128xf32>,
        %59 = arith.truncf %56 : vector<128x128xf32> to vector<128x128xbf16>
        %60 = arith.index_cast %39 : i32 to index
        %c0_35 = arith.constant 0 : index
        %61 = vector.load %arg11[%60, %c0_35] : memref<256x128xbf16, #tpu.memory_space<vmem>>, vector<128x128xbf16>
        tpu.vector_store %arg11[%60, %c0_35], %59 {strides = array<i32>} : memref<256x128xbf16, #tpu.memory_space<vmem>>, vector<128x128xbf16>,
      }
      %c2_i32_20 = arith.constant 2 : i32
      %c0_21 = arith.constant 0 : index
      %c0_22 = arith.constant 0 : index
      %32 = vector.load %arg4[%c0_21, %c0_22] : memref<8x256xbf16, #tpu.memory_space<vmem>>, vector<8x256xbf16>
      %c0_23 = arith.constant 0 : index
      %c0_24 = arith.constant 0 : index
      %33 = vector.load %arg11[%c0_23, %c0_24] : memref<256x128xbf16, #tpu.memory_space<vmem>>, vector<256x128xbf16>
      %cst_25 = arith.constant dense<0.000000e+00> : vector<8x128xf32>
      %34 = tpu.matmul %32, %33, %cst_25 {dimension_numbers = #tpu.dot_dimension_numbers<[1], [0], [0], [1], [0, 0, 1, 1], [], []>} : vector<8x256xbf16>, vector<256x128xbf16>, vector<8x128xf32> -> vector<8x128xf32>
      %c0_26 = arith.constant 0 : index
      %c0_27 = arith.constant 0 : index
      %c0_28 = arith.constant 0 : index
      %35 = vector.load %arg9[%c0_26, %c0_27, %c0_28] : memref<1x8x128xf32, #tpu.memory_space<vmem>>, vector<1x8x128xf32>
      %36 = vector.shape_cast %35 : vector<1x8x128xf32> to vector<8x128xf32>
      %37 = vector.shape_cast %34 : vector<8x128xf32> to vector<1x8x128xf32>
      tpu.vector_store %arg9[%c0_26, %c0_27, %c0_28], %37 {strides = array<i32>} : memref<1x8x128xf32, #tpu.memory_space<vmem>>, vector<1x8x128xf32>,
    } else {
    }
    return
  }
  func.func @transform_0(%arg0: i32, %arg1: i32) -> (i32, i32) {
    %c0_i32 = arith.constant 0 : i32
    %0 = arith.cmpi eq, %arg0, %c0_i32 : i32
    %c0_i32_0 = arith.constant 0 : i32
    %1 = arith.select %0, %arg1, %c0_i32_0 : i32
    %c0_i32_1 = arith.constant 0 : i32
    %c0_i32_2 = arith.constant 0 : i32
    return %1, %c0_i32_1 : i32, i32
  }
  func.func @transform_1(%arg0: i32, %arg1: i32) -> (i32, i32) {
    %c0_i32 = arith.constant 0 : i32
    %c0_i32_0 = arith.constant 0 : i32
    %c0_i32_1 = arith.constant 0 : i32
    return %c0_i32, %c0_i32_0 : i32, i32
  }
  func.func @transform_2(%arg0: i32, %arg1: i32) -> (i32, i32) {
    %c0_i32 = arith.constant 0 : i32
    %c0_i32_0 = arith.constant 0 : i32
    %c0_i32_1 = arith.constant 0 : i32
    return %c0_i32, %c0_i32_0 : i32, i32
  }
  func.func @transform_3(%arg0: i32, %arg1: i32) -> (i32, i32) {
    %c0_i32 = arith.constant 0 : i32
    %c0_i32_0 = arith.constant 0 : i32
    %c0_i32_1 = arith.constant 0 : i32
    return %c0_i32, %c0_i32_0 : i32, i32
  }
  func.func @transform_4(%arg0: i32, %arg1: i32) -> (i32, i32) {
    %c0_i32 = arith.constant 0 : i32
    %c0_i32_0 = arith.constant 0 : i32
    %c0_i32_1 = arith.constant 0 : i32
    return %c0_i32, %c0_i32_0 : i32, i32
  }
  func.func @transform_5(%arg0: i32, %arg1: i32) -> (i32, i32, i32) {
    %c1_i32 = arith.constant 1 : i32
    %0 = arith.subi %arg0, %c1_i32 : i32
    %c0_i32 = arith.constant 0 : i32
    %1 = arith.maxsi %0, %c0_i32 : i32
    %c0_i32_0 = arith.constant 0 : i32
    %c0_i32_1 = arith.constant 0 : i32
    %c0_i32_2 = arith.constant 0 : i32
    return %1, %c0_i32_0, %c0_i32_1 : i32, i32, i32
  }
  func.func @transform_6(%arg0: i32, %arg1: i32) -> (i32, i32, i32) {
    %c1_i32 = arith.constant 1 : i32
    %0 = arith.subi %arg0, %c1_i32 : i32
    %c0_i32 = arith.constant 0 : i32
    %1 = arith.maxsi %0, %c0_i32 : i32
    %c0_i32_0 = arith.constant 0 : i32
    %c0_i32_1 = arith.constant 0 : i32
    %c0_i32_2 = arith.constant 0 : i32
    return %1, %c0_i32_0, %c0_i32_1 : i32, i32, i32
  }
  func.func @transform_7(%arg0: i32, %arg1: i32) -> (i32, i32, i32) {
    %c0_i32 = arith.constant 0 : i32
    %c0_i32_0 = arith.constant 0 : i32
    %c0_i32_1 = arith.constant 0 : i32
    return %arg0, %c0_i32, %c0_i32_0 : i32, i32, i32
  }
}

</mosaic_0001>

<llo_original>
// kernel: tpu_custom_call.1
$region0: #{tpu_custom_call.1}
  #allocation0 [shape = 'u32[]', space=smem, size = 0x4, offset = 0x4, fixed_abs, tag = 'smem constant byte address 0x4 - core index']
  #allocation1 [shape = 'u32[72,128]{1,0:T(1,128)}', space=vmem, size = 0x9000, scoped, tag = 'internal scratch']
  #allocation2 [shape = 'f32[256,128]{1,0:T(8,128)}', space=vmem, size = 0x20000, scoped, tag = 'scratch operand']
  #allocation3 [shape = 'bf16[256,128]{1,0:T(8,128)(2,1)}', space=vmem, size = 0x10000, scoped, tag = 'scratch operand']
  #allocation4 [shape = 'f32[1,128]{1,0:T(1,128)}', space=vmem, size = 0x200, scoped, tag = 'scratch operand']
  #allocation5 [shape = 'f32[1,128]{1,0:T(1,128)}', space=vmem, size = 0x200, scoped, tag = 'scratch operand']
  %s0 = inlined_call_operand.hbm [shape: bf16[256,128], index: 0, kind: input, shape index: {}]
  %s1 = inlined_call_operand.hbm [shape: bf16[256,256], index: 1, kind: input, shape index: {}]
  %s2 = inlined_call_operand.hbm [shape: bf16[8,256], index: 2, kind: input, shape index: {}]
  %s3 = inlined_call_operand.hbm [shape: bf16[128,128], index: 3, kind: input, shape index: {}]
  %s4 = inlined_call_operand.vmem [shape: f32[1,128], index: 4, kind: input, shape index: {}]
  %s5 = inlined_call_operand.hbm [shape: bf16[2,128,128], index: 5, kind: input, shape index: {}]
  %s6 = inlined_call_operand.vmem [shape: f32[2,1,128], index: 6, kind: input, shape index: {}]
  %s7 = inlined_call_operand.hbm [shape: f32[3,8,128], index: 7, kind: output, shape index: {}]
  %s8 = sld [smem:[#allocation0]]
  $region111: #{tpu_custom_call.1} parent=0
    _
  %s10 = ssub.s32 1, %s8
  %s11 = scalar_select 0, %s10, %s8
  $region1: #{tpu_custom_call.1} parent=0
    #allocation6 [shape = 'u8[65536]{0}', space=vmem, size = 0x10000, scoped, tag = 'input window, operand 0']
    #allocation7 [shape = 's32[2]{0}', space=sflag, size = 0x8, scoped, tag = 'scoped memory for tpu_custom_call.1']
    #allocation8 [shape = 's32[2]{0}', space=sflag, size = 0x8, scoped, tag = 'scoped memory for tpu_custom_call.1']
    #allocation9 [shape = 'u8[131072]{0}', space=vmem, size = 0x20000, scoped, tag = 'input window, operand 1, single buffered']
    #allocation10 [shape = 's32[1]{0}', space=sflag, size = 0x4, scoped, tag = 'scoped memory for tpu_custom_call.1']
    #allocation11 [shape = 'u8[4096]{0}', space=vmem, size = 0x1000, scoped, tag = 'input window, operand 2, single buffered']
    #allocation12 [shape = 'u8[32768]{0}', space=vmem, size = 0x8000, scoped, tag = 'input window, operand 3, single buffered']
    #allocation13 [shape = 's32[1]{0}', space=sflag, size = 0x4, scoped, tag = 'scoped memory for tpu_custom_call.1']
    #allocation14 [shape = 'u8[65536]{0}', space=vmem, size = 0x10000, scoped, tag = 'input window, operand 5']
    #allocation15 [shape = 'u8[8192]{0}', space=vmem, size = 0x2000, scoped, tag = 'output window, operand 0']
    %12 = vsyncpa [#allocation7], 0
    %s13 = scalar_lea.sflag [#allocation7], 1
    %14 = vsyncpa %s13, 0
    %15 = vsyncpa [#allocation10], 0
    %16 = vsyncpa [#allocation13], 0
    %17 = vsyncpa [#allocation8], 0
    %s18 = scalar_lea.sflag [#allocation8], 1
    %19 = vsyncpa %s18, 0
    loop: start=0, step=1, limit=8
    $region2: #{tpu_custom_call.1} parent=1 // loop_pre_header
      _
    $region3: #{tpu_custom_call.1} parent=1 // loop_header
      %s21 = sphi 0, %s25
      %p22 = scmp.ge.s32.totalorder %s21, 8
      %s28 = sphi 0, %s40
      %s29 = sphi 0, %s36
      %s30 = sphi 0, %s28
      %s31 = sphi 0, %s29
      %s32 = sphi 0, %s30
      %s33 = sphi 0, %s31
      %s47 = sphi 0, %s49
      %s50 = sphi 0, %s47
      %s51 = sphi 0, %s50
      %s67 = sphi 0, %s51
      %s71 = sphi 0, %s71
      %s73 = sphi 0, %s71
      %s74 = sphi 0, %s73
      %s88 = sphi 0, %s74
      %s92 = sphi 0, %s92
      %s94 = sphi 0, %s92
      %s95 = sphi 0, %s94
      %s109 = sphi 0, %s95
      %s113 = sphi 0, %s113
      %s115 = sphi 0, %s113
      %s116 = sphi 0, %s115
      %s130 = sphi 0, %s116
      %s134 = sphi 0, %s134
      %s136 = sphi 0, %s134
      %s137 = sphi 0, %s136
      %s151 = sphi 0, %s137
      %s163 = sphi 0, %s165
      %s166 = sphi 0, %s163
      %s167 = sphi 0, %s166
      %s183 = sphi 0, %s167
      %s195 = sphi 0, %s197
      %s198 = sphi 0, %s195
      %s199 = sphi 0, %s198
      %s215 = sphi 0, %s199
      %s221 = sphi 0, %s223
      %s224 = sphi 0, %s221
      %s225 = sphi 0, %s224
      %s241 = sphi 0, %s225
    $region4: #{tpu_custom_call.1} parent=1 // loop_header_branch
      %24 = sbr.rel (%p22) target = $region8
    $region5: #{tpu_custom_call.1} parent=1 // loop_body
      %s26 = ssub.s32 %s21, 1
      %s27 = ssub.s32 %s21, 2
      %s34 = sadd.s32 1, %s29
      %p35 = scmp.ge.s32.totalorder %s34, 2
      %s36 = scalar_select %p35, 0, %s34
      %s37 = sadd.s32 1, %s28
      %s38 = scalar_select %p35, %s37, %s28
      %p39 = scmp.ge.s32.totalorder %s38, 3
      %s40 = scalar_select %p39, 0, %s38
      %p41 = scmp.eq.s32.totalorder %s28, 0
      %s42 = scalar_select %p41, %s29, 0
      %p43 = scmp.eq.s32.totalorder %s40, 0
      %s44 = scalar_select %p43, %s36, 0
      %s45 = ssub.s32 %s42, %s44
      %p46 = scmp.eq.s32.totalorder %s45, 0
      %s48 = sadd.s32 %s47, 1
      %s49 = scalar_select %p46, %s47, %s48
      %p52 = pneg %p46
      %p53 = scmp.eq.s32.totalorder %s21, 5
      %p54 = por %p52, %p53
      %p55 = scmp.ne.s32.totalorder %s47, %s50
      %p56 = scmp.eq.s32.totalorder %s21, 0
      %p57 = por %p55, %p56
      %p58 = scmp.ne.s32.totalorder %s47, %s50
      %p59 = scmp.eq.s32.totalorder %s26, 5
      %p60 = por %p58, %p59
      %p61 = scmp.ne.s32.totalorder %s50, %s51
      %p62 = scmp.eq.s32.totalorder %s26, 0
      %p63 = por %p61, %p62
      %p64 = scmp.ne.s32.totalorder %s50, %s51
      %p65 = scmp.eq.s32.totalorder %s27, 5
      %p66 = por %p64, %p65
      %p68 = scmp.ne.s32.totalorder %s51, %s67
      %p69 = scmp.eq.s32.totalorder %s27, 0
      %p70 = por %p68, %p69
      %s72 = sadd.s32 %s71, 1
      %p75 = scmp.eq.s32.totalorder %s21, 5
      %p76 = scmp.ne.s32.totalorder %s71, %s73
      %p77 = scmp.eq.s32.totalorder %s21, 0
      %p78 = por %p76, %p77
      %p79 = scmp.ne.s32.totalorder %s71, %s73
      %p80 = scmp.eq.s32.totalorder %s26, 5
      %p81 = por %p79, %p80
      %p82 = scmp.ne.s32.totalorder %s73, %s74
      %p83 = scmp.eq.s32.totalorder %s26, 0
      %p84 = por %p82, %p83
      %p85 = scmp.ne.s32.totalorder %s73, %s74
      %p86 = scmp.eq.s32.totalorder %s27, 5
      %p87 = por %p85, %p86
      %p89 = scmp.ne.s32.totalorder %s74, %s88
      %p90 = scmp.eq.s32.totalorder %s27, 0
      %p91 = por %p89, %p90
      %s93 = sadd.s32 %s92, 1
      %p96 = scmp.eq.s32.totalorder %s21, 5
      %p97 = scmp.ne.s32.totalorder %s92, %s94
      %p98 = scmp.eq.s32.totalorder %s21, 0
      %p99 = por %p97, %p98
      %p100 = scmp.ne.s32.totalorder %s92, %s94
      %p101 = scmp.eq.s32.totalorder %s26, 5
      %p102 = por %p100, %p101
      %p103 = scmp.ne.s32.totalorder %s94, %s95
      %p104 = scmp.eq.s32.totalorder %s26, 0
      %p105 = por %p103, %p104
      %p106 = scmp.ne.s32.totalorder %s94, %s95
      %p107 = scmp.eq.s32.totalorder %s27, 5
      %p108 = por %p106, %p107
      %p110 = scmp.ne.s32.totalorder %s95, %s109
      %p111 = scmp.eq.s32.totalorder %s27, 0
      %p112 = por %p110, %p111
      %s114 = sadd.s32 %s113, 1
      %p117 = scmp.eq.s32.totalorder %s21, 5
      %p118 = scmp.ne.s32.totalorder %s113, %s115
      %p119 = scmp.eq.s32.totalorder %s21, 0
      %p120 = por %p118, %p119
      %p121 = scmp.ne.s32.totalorder %s113, %s115
      %p122 = scmp.eq.s32.totalorder %s26, 5
      %p123 = por %p121, %p122
      %p124 = scmp.ne.s32.totalorder %s115, %s116
      %p125 = scmp.eq.s32.totalorder %s26, 0
      %p126 = por %p124, %p125
      %p127 = scmp.ne.s32.totalorder %s115, %s116
      %p128 = scmp.eq.s32.totalorder %s27, 5
      %p129 = por %p127, %p128
      %p131 = scmp.ne.s32.totalorder %s116, %s130
      %p132 = scmp.eq.s32.totalorder %s27, 0
      %p133 = por %p131, %p132
      %s135 = sadd.s32 %s134, 1
      %p138 = scmp.eq.s32.totalorder %s21, 5
      %p139 = scmp.ne.s32.totalorder %s134, %s136
      %p140 = scmp.eq.s32.totalorder %s21, 0
      %p141 = por %p139, %p140
      %p142 = scmp.ne.s32.totalorder %s134, %s136
      %p143 = scmp.eq.s32.totalorder %s26, 5
      %p144 = por %p142, %p143
      %p145 = scmp.ne.s32.totalorder %s136, %s137
      %p146 = scmp.eq.s32.totalorder %s26, 0
      %p147 = por %p145, %p146
      %p148 = scmp.ne.s32.totalorder %s136, %s137
      %p149 = scmp.eq.s32.totalorder %s27, 5
      %p150 = por %p148, %p149
      %p152 = scmp.ne.s32.totalorder %s137, %s151
      %p153 = scmp.eq.s32.totalorder %s27, 0
      %p154 = por %p152, %p153
      %s155 = ssub.s32 %s28, 1
      %p156 = scmp.gt.s32.totalorder %s155, 0
      %s157 = scalar_select %p156, %s155, 0
      %s158 = ssub.s32 %s40, 1
      %p159 = scmp.gt.s32.totalorder %s158, 0
      %s160 = scalar_select %p159, %s158, 0
      %s161 = ssub.s32 %s157, %s160
      %p162 = scmp.eq.s32.totalorder %s161, 0
      %s164 = sadd.s32 %s163, 1
      %s165 = scalar_select %p162, %s163, %s164
      %p168 = pneg %p162
      %p169 = scmp.eq.s32.totalorder %s21, 5
      %p170 = por %p168, %p169
      %p171 = scmp.ne.s32.totalorder %s163, %s166
      %p172 = scmp.eq.s32.totalorder %s21, 0
      %p173 = por %p171, %p172
      %p174 = scmp.ne.s32.totalorder %s163, %s166
      %p175 = scmp.eq.s32.totalorder %s26, 5
      %p176 = por %p174, %p175
      %p177 = scmp.ne.s32.totalorder %s166, %s167
      %p178 = scmp.eq.s32.totalorder %s26, 0
      %p179 = por %p177, %p178
      %p180 = scmp.ne.s32.totalorder %s166, %s167
      %p181 = scmp.eq.s32.totalorder %s27, 5
      %p182 = por %p180, %p181
      %p184 = scmp.ne.s32.totalorder %s167, %s183
      %p185 = scmp.eq.s32.totalorder %s27, 0
      %p186 = por %p184, %p185
      %s187 = ssub.s32 %s28, 1
      %p188 = scmp.gt.s32.totalorder %s187, 0
      %s189 = scalar_select %p188, %s187, 0
      %s190 = ssub.s32 %s40, 1
      %p191 = scmp.gt.s32.totalorder %s190, 0
      %s192 = scalar_select %p191, %s190, 0
      %s193 = ssub.s32 %s189, %s192
      %p194 = scmp.eq.s32.totalorder %s193, 0
      %s196 = sadd.s32 %s195, 1
      %s197 = scalar_select %p194, %s195, %s196
      %p200 = pneg %p194
      %p201 = scmp.eq.s32.totalorder %s21, 5
      %p202 = por %p200, %p201
      %p203 = scmp.ne.s32.totalorder %s195, %s198
      %p204 = scmp.eq.s32.totalorder %s21, 0
      %p205 = por %p203, %p204
      %p206 = scmp.ne.s32.totalorder %s195, %s198
      %p207 = scmp.eq.s32.totalorder %s26, 5
      %p208 = por %p206, %p207
      %p209 = scmp.ne.s32.totalorder %s198, %s199
      %p210 = scmp.eq.s32.totalorder %s26, 0
      %p211 = por %p209, %p210
      %p212 = scmp.ne.s32.totalorder %s198, %s199
      %p213 = scmp.eq.s32.totalorder %s27, 5
      %p214 = por %p212, %p213
      %p216 = scmp.ne.s32.totalorder %s199, %s215
      %p217 = scmp.eq.s32.totalorder %s27, 0
      %p218 = por %p216, %p217
      %s219 = ssub.s32 %s28, %s40
      %p220 = scmp.eq.s32.totalorder %s219, 0
      %s222 = sadd.s32 %s221, 1
      %s223 = scalar_select %p220, %s221, %s222
      %p226 = pneg %p220
      %p227 = scmp.eq.s32.totalorder %s21, 5
      %p228 = por %p226, %p227
      %p229 = scmp.ne.s32.totalorder %s221, %s224
      %p230 = scmp.eq.s32.totalorder %s21, 0
      %p231 = por %p229, %p230
      %p232 = scmp.ne.s32.totalorder %s221, %s224
      %p233 = scmp.eq.s32.totalorder %s26, 5
      %p234 = por %p232, %p233
      %p235 = scmp.ne.s32.totalorder %s224, %s225
      %p236 = scmp.eq.s32.totalorder %s26, 0
      %p237 = por %p235, %p236
      %p238 = scmp.ne.s32.totalorder %s224, %s225
      %p239 = scmp.eq.s32.totalorder %s27, 5
      %p240 = por %p238, %p239
      %p242 = scmp.ne.s32.totalorder %s225, %s241
      %p243 = scmp.eq.s32.totalorder %s27, 0
      %p244 = por %p242, %p243
      %p245 = scmp.le.s32.totalorder 1, %s21
      %p246 = scmp.lt.s32.totalorder %s21, 7
      %p247 = pnand %p245, %p246
      %p248 = pneg %p247
      // Predicated region
      $region9: #{tpu_custom_call.1} parent=5 // pred_check
        _
      $region10: #{tpu_custom_call.1} parent=5 // pred_check_branch
        %250 = sbr.rel (%p247) target = $region12
      $region11: #{tpu_custom_call.1} parent=5 // pred_region
        %s251 = ssub.s32 %s21, 1
        // Predicated region
        $region13: #{tpu_custom_call.1} parent=11 // pred_check
          %p252 = pneg %p84
        $region14: #{tpu_custom_call.1} parent=11 // pred_check_branch
          %254 = sbr.rel (%p252) target = $region16
        $region15: #{tpu_custom_call.1} parent=11 // pred_region
          %256 = vsyncadd [#allocation10], 0
          %s257 = sshll.u32 %s1, 4
          %s258 = int_to_ptr.hbm [resolvable:$true] %s257
          %s259 = sshll.u32 [#allocation9], 4
          %s260 = int_to_ptr.vmem [resolvable:$true] %s259
          %265 = dma.hbm_to_vmem [thread:$0]  %s258, 4096, %s260, [#allocation10], 128, 128, 8
        $region16: #{tpu_custom_call.1} parent=11 // pred_fallthru
          _
        // Predicated region
        $region17: #{tpu_custom_call.1} parent=11 // pred_check
          %p266 = pneg %p105
        $region18: #{tpu_custom_call.1} parent=11 // pred_check_branch
          %268 = sbr.rel (%p266) target = $region20
        $region19: #{tpu_custom_call.1} parent=11 // pred_region
          %270 = vsyncadd [#allocation10], 0
          %s272 = sshll.u32 %s2, 4
          %s273 = int_to_ptr.hbm [resolvable:$true] %s272
          %s274 = sshll.u32 [#allocation11], 4
          %s275 = int_to_ptr.vmem [resolvable:$true] %s274
          %277 = dma.hbm_to_vmem [thread:$0]  %s273, 128, %s275, [#allocation10]
        $region20: #{tpu_custom_call.1} parent=11 // pred_fallthru
          _
        // Predicated region
        $region21: #{tpu_custom_call.1} parent=11 // pred_check
          %p278 = pneg %p126
        $region22: #{tpu_custom_call.1} parent=11 // pred_check_branch
          %280 = sbr.rel (%p278) target = $region24
        $region23: #{tpu_custom_call.1} parent=11 // pred_region
          %282 = vsyncadd [#allocation13], 0
          %s283 = sshll.u32 %s3, 4
          %s284 = int_to_ptr.hbm [resolvable:$true] %s283
          %s285 = sshll.u32 [#allocation12], 4
          %s286 = int_to_ptr.vmem [resolvable:$true] %s285
          %291 = dma.hbm_to_vmem [thread:$0]  %s284, 1024, %s286, [#allocation13], 64, 64, 4
        $region24: #{tpu_custom_call.1} parent=11 // pred_fallthru
          _
        // Predicated region
        $region25: #{tpu_custom_call.1} parent=11 // pred_check
          %p292 = pneg %p147
        $region26: #{tpu_custom_call.1} parent=11 // pred_check_branch
          %294 = sbr.rel (%p292) target = $region28
        $region27: #{tpu_custom_call.1} parent=11 // pred_region
          _
        $region28: #{tpu_custom_call.1} parent=11 // pred_fallthru
          _
      $region12: #{tpu_custom_call.1} parent=5 // pred_fallthru
        _
      %p295 = scmp.lt.s32.totalorder %s21, 6
      // Predicated region
      $region29: #{tpu_custom_call.1} parent=5 // pred_check
        %p296 = pneg %p295
      $region30: #{tpu_custom_call.1} parent=5 // pred_check_branch
        %298 = sbr.rel (%p296) target = $region32
      $region31: #{tpu_custom_call.1} parent=5 // pred_region
        // Predicated region
        $region33: #{tpu_custom_call.1} parent=31 // pred_check
          %p299 = pneg %p57
        $region34: #{tpu_custom_call.1} parent=31 // pred_check_branch
          %301 = sbr.rel (%p299) target = $region36
        $region35: #{tpu_custom_call.1} parent=31 // pred_region
          %s302 = sand.u32 %s21, 1
          %s303 = scalar_lea.sflag [#allocation7], %s302
          %s304 = sand.u32 %s47, 1
          %s305 = smul.addr %s304, 64
          %s306 = scalar_lea.vmem [#allocation6], %s305
          %p307 = scmp.eq.s32.totalorder %s28, 0
          %s308 = scalar_select %p307, %s29, 0
          %s309 = smul.u32 16, %s308
          %311 = vsyncadd %s303, 0
          %s312 = smul.addr %s309, 4
          %s313 = scalar_lea.hbm %s0, %s312
          %s314 = sshll.u32 %s313, 4
          %s315 = int_to_ptr.hbm [resolvable:$true] %s314
          %s316 = sshll.u32 %s306, 4
          %s317 = int_to_ptr.vmem [resolvable:$true] %s316
          %322 = dma.hbm_to_vmem [thread:$0]  %s315, 1024, %s317, %s303, 64, 64, 4
        $region36: #{tpu_custom_call.1} parent=31 // pred_fallthru
          _
        // Predicated region
        $region37: #{tpu_custom_call.1} parent=31 // pred_check
          %p323 = pneg %p173
        $region38: #{tpu_custom_call.1} parent=31 // pred_check_branch
          %325 = sbr.rel (%p323) target = $region40
        $region39: #{tpu_custom_call.1} parent=31 // pred_region
          %s326 = sand.u32 %s21, 1
          %s327 = scalar_lea.sflag [#allocation7], %s326
          %s328 = sand.u32 %s163, 1
          %s329 = smul.addr %s328, 64
          %s330 = scalar_lea.vmem [#allocation14], %s329
          %s331 = ssub.s32 %s28, 1
          %p332 = scmp.gt.s32.totalorder %s331, 0
          %s333 = scalar_select %p332, %s331, 0
          %335 = vsyncadd %s327, 0
          %s336 = smul.addr %s333, 16
          %s337 = smul.addr %s336, 4
          %s338 = scalar_lea.hbm %s5, %s337
          %s339 = sshll.u32 %s338, 4
          %s340 = int_to_ptr.hbm [resolvable:$true] %s339
          %s341 = sshll.u32 %s330, 4
          %s342 = int_to_ptr.vmem [resolvable:$true] %s341
          %347 = dma.hbm_to_vmem [thread:$0]  %s340, 1024, %s342, %s327, 64, 64, 4
        $region40: #{tpu_custom_call.1} parent=31 // pred_fallthru
          _
        // Predicated region
        $region41: #{tpu_custom_call.1} parent=31 // pred_check
          %p348 = pneg %p205
        $region42: #{tpu_custom_call.1} parent=31 // pred_check_branch
          %350 = sbr.rel (%p348) target = $region44
        $region43: #{tpu_custom_call.1} parent=31 // pred_region
          %s351 = ssub.s32 %s28, 1
          %p352 = scmp.gt.s32.totalorder %s351, 0
          %s353 = scalar_select %p352, %s351, 0
          %p354 = scmp.lt.s32.totalorder %s353, 1
          %s355 = scalar_select %p354, %s353, 1
          %s356 = scalar_lea.vmem %s6, %s355
          %s357 = ssub.s32 %s28, 1
          %p358 = scmp.gt.s32.totalorder %s357, 0
          %s359 = scalar_select %p358, %s357, 0
        $region44: #{tpu_custom_call.1} parent=31 // pred_fallthru
          _
      $region32: #{tpu_custom_call.1} parent=5 // pred_fallthru
        _
      %p360 = scmp.le.s32.totalorder 1, %s21
      %p361 = scmp.lt.s32.totalorder %s21, 7
      %p362 = pnand %p360, %p361
      %p363 = pneg %p362
      // Predicated region
      $region45: #{tpu_custom_call.1} parent=5 // pred_check
        _
      $region46: #{tpu_custom_call.1} parent=5 // pred_check_branch
        %365 = sbr.rel (%p362) target = $region48
      $region47: #{tpu_custom_call.1} parent=5 // pred_region
        %s366 = ssub.s32 %s21, 1
        %s367 = sand.u32 %s26, 1
        %s368 = scalar_lea.sflag [#allocation7], %s367
        %s369 = sand.u32 %s50, 1
        %s370 = smul.addr %s369, 64
        %s371 = scalar_lea.vmem [#allocation6], %s370
        // Predicated region
        $region49: #{tpu_custom_call.1} parent=47 // pred_check
          %p372 = pneg %p63
        $region50: #{tpu_custom_call.1} parent=47 // pred_check_branch
          %374 = sbr.rel (%p372) target = $region52
        $region51: #{tpu_custom_call.1} parent=47 // pred_region
          %376 = dma.done %s368, 1024
        $region52: #{tpu_custom_call.1} parent=47 // pred_fallthru
          _
        // Predicated region
        $region53: #{tpu_custom_call.1} parent=47 // pred_check
          %p377 = pneg %p84
        $region54: #{tpu_custom_call.1} parent=47 // pred_check_branch
          %379 = sbr.rel (%p377) target = $region56
        $region55: #{tpu_custom_call.1} parent=47 // pred_region
          %381 = dma.done [#allocation10], 4096
        $region56: #{tpu_custom_call.1} parent=47 // pred_fallthru
          _
        // Predicated region
        $region57: #{tpu_custom_call.1} parent=47 // pred_check
          %p382 = pneg %p105
        $region58: #{tpu_custom_call.1} parent=47 // pred_check_branch
          %384 = sbr.rel (%p382) target = $region60
        $region59: #{tpu_custom_call.1} parent=47 // pred_region
          %386 = dma.done [#allocation10], 128
        $region60: #{tpu_custom_call.1} parent=47 // pred_fallthru
          _
        // Predicated region
        $region61: #{tpu_custom_call.1} parent=47 // pred_check
          %p387 = pneg %p126
        $region62: #{tpu_custom_call.1} parent=47 // pred_check_branch
          %389 = sbr.rel (%p387) target = $region64
        $region63: #{tpu_custom_call.1} parent=47 // pred_region
          %391 = dma.done [#allocation13], 1024
        $region64: #{tpu_custom_call.1} parent=47 // pred_fallthru
          _
        %s392 = sand.u32 %s26, 1
        %s393 = scalar_lea.sflag [#allocation7], %s392
        %s394 = sand.u32 %s166, 1
        %s395 = smul.addr %s394, 64
        %s396 = scalar_lea.vmem [#allocation14], %s395
        // Predicated region
        $region65: #{tpu_custom_call.1} parent=47 // pred_check
          %p397 = pneg %p179
        $region66: #{tpu_custom_call.1} parent=47 // pred_check_branch
          %399 = sbr.rel (%p397) target = $region68
        $region67: #{tpu_custom_call.1} parent=47 // pred_region
          %401 = dma.done %s393, 1024
        $region68: #{tpu_custom_call.1} parent=47 // pred_fallthru
          _
        %s402 = sand.u32 %s26, 1
        %s403 = scalar_lea.sflag [#allocation7], %s402
        %s404 = sand.u32 %s50, 1
        %s405 = smul.addr %s404, 64
        %s406 = scalar_lea.vmem [#allocation6], %s405
        %p407 = pneg %p63
        %p408 = pneg %p60
        %p409 = pneg %p84
        %p410 = pneg %p81
        %p411 = pneg %p105
        %p412 = pneg %p102
        %p413 = pneg %p126
        %p414 = pneg %p123
        %p415 = pneg %p147
        %p416 = pneg %p144
        %s417 = sand.u32 %s26, 1
        %s418 = scalar_lea.sflag [#allocation7], %s417
        %s419 = sand.u32 %s166, 1
        %s420 = smul.addr %s419, 64
        %s421 = scalar_lea.vmem [#allocation14], %s420
        %p422 = pneg %p179
        %p423 = pneg %p176
        %s424 = ssub.s32 %s30, 1
        %p425 = scmp.gt.s32.totalorder %s424, 0
        %s426 = scalar_select %p425, %s424, 0
        %p427 = scmp.lt.s32.totalorder %s426, 1
        %s428 = scalar_select %p427, %s426, 1
        %s429 = scalar_lea.vmem %s6, %s428
        %p430 = pneg %p211
        %p431 = pneg %p208
        %p432 = pneg %p237
        %p433 = pneg %p234
        %s434 = sand.u32 %s224, 1
        %s435 = scalar_lea.sflag [#allocation8], %s434
        %s436 = sand.u32 %s224, 1
        %s437 = smul.addr %s436, 8
        %s438 = scalar_lea.vmem [#allocation15], %s437
        %p439 = scmp.eq.s32.totalorder %s30, 0
        %s440 = scalar_select %p439, %s31, 0
        %s441 = smul.u32 16, %s440
        %s442 = ssub.s32 %s30, 1
        %p443 = scmp.gt.s32.totalorder %s442, 0
        %s444 = scalar_select %p443, %s442, 0
        %s445 = ssub.s32 %s30, 1
        %p446 = scmp.gt.s32.totalorder %s445, 0
        %s447 = scalar_select %p446, %s445, 0
        %p448 = scmp.lt.s32.totalorder %s447, 1
        %s449 = scalar_select %p448, %s447, 1
        %s450 = scalar_lea.vmem %s6, %s449
        %s451 = ssub.s32 %s30, 1
        %p452 = scmp.gt.s32.totalorder %s451, 0
        %s453 = scalar_select %p452, %s451, 0
        %s454 = smul.u32 %s31, 128
        %v455 = vlaneseq
        %v456 = vshrl.u32 %v455, 7
        %v457 = vadd.s32 %v456, 8
        %v458 = vadd.s32 %v456, 16
        %v459 = vadd.s32 %v456, 24
        %v460 = vadd.s32 %v456, 32
        %v461 = vadd.s32 %v456, 40
        %v462 = vadd.s32 %v456, 48
        %v463 = vadd.s32 %v456, 56
        %v464 = vadd.s32 %v456, 64
        %v465 = vadd.s32 %v456, 72
        %v466 = vadd.s32 %v456, 80
        %v467 = vadd.s32 %v456, 88
        %v468 = vadd.s32 %v456, 96
        %v469 = vadd.s32 %v456, 104
        %v470 = vadd.s32 %v456, 112
        %v471 = vadd.s32 %v456, 120
        %v472 = vstv %s454
        %v473 = vadd.s32 %v472, %v456
        %v474 = vadd.s32 %v472, %v457
        %v475 = vadd.s32 %v472, %v458
        %v476 = vadd.s32 %v472, %v459
        %v477 = vadd.s32 %v472, %v460
        %v478 = vadd.s32 %v472, %v461
        %v479 = vadd.s32 %v472, %v462
        %v480 = vadd.s32 %v472, %v463
        %v481 = vadd.s32 %v472, %v464
        %v482 = vadd.s32 %v472, %v465
        %v483 = vadd.s32 %v472, %v466
        %v484 = vadd.s32 %v472, %v467
        %v485 = vadd.s32 %v472, %v468
        %v486 = vadd.s32 %v472, %v469
        %v487 = vadd.s32 %v472, %v470
        %v488 = vadd.s32 %v472, %v471
        %vm489 = vcmp.lt.s32.totalorder %v473, 256
        %vm490 = vcmp.lt.s32.totalorder %v474, 256
        %vm491 = vcmp.lt.s32.totalorder %v475, 256
        %vm492 = vcmp.lt.s32.totalorder %v476, 256
        %vm493 = vcmp.lt.s32.totalorder %v477, 256
        %vm494 = vcmp.lt.s32.totalorder %v478, 256
        %vm495 = vcmp.lt.s32.totalorder %v479, 256
        %vm496 = vcmp.lt.s32.totalorder %v480, 256
        %vm497 = vcmp.lt.s32.totalorder %v481, 256
        %vm498 = vcmp.lt.s32.totalorder %v482, 256
        %vm499 = vcmp.lt.s32.totalorder %v483, 256
        %vm500 = vcmp.lt.s32.totalorder %v484, 256
        %vm501 = vcmp.lt.s32.totalorder %v485, 256
        %vm502 = vcmp.lt.s32.totalorder %v486, 256
        %vm503 = vcmp.lt.s32.totalorder %v487, 256
        %vm504 = vcmp.lt.s32.totalorder %v488, 256
        %p505 = scmp.eq.s32.totalorder %s31, 0
        // Predicated region
        $region69: #{tpu_custom_call.1} parent=47 // pred_check
          %p506 = pneg %p505
        $region70: #{tpu_custom_call.1} parent=47 // pred_check_branch
          %508 = sbr.rel (%p506) target = $region72
        $region71: #{tpu_custom_call.1} parent=47 // pred_region
          %509 = vst [vmem:[#allocation4] sm:$0x1] 0.0
        $region72: #{tpu_custom_call.1} parent=47 // pred_fallthru
          _
        %p510 = scmp.eq.s32.totalorder %s30, 0
        // Predicated region
        $region73: #{tpu_custom_call.1} parent=47 // pred_check
          %p511 = pneg %p510
        $region74: #{tpu_custom_call.1} parent=47 // pred_check_branch
          %513 = sbr.rel (%p511) target = $region76
        $region75: #{tpu_custom_call.1} parent=47 // pred_region
          %v514 = vld [vmem:[%s371] sm:$0xf]
          %v515 = vld [vmem:[%s371 + $0x4] sm:$0xf]
          %v516 = vld [vmem:[%s371 + $0x8] sm:$0xf]
          %v517 = vld [vmem:[%s371 + $0xc] sm:$0xf]
          %v518 = vld [vmem:[%s371 + $0x10] sm:$0xf]
          %v519 = vld [vmem:[%s371 + $0x14] sm:$0xf]
          %v520 = vld [vmem:[%s371 + $0x18] sm:$0xf]
          %v521 = vld [vmem:[%s371 + $0x1c] sm:$0xf]
          %v522 = vld [vmem:[%s371 + $0x20] sm:$0xf]
          %v523 = vld [vmem:[%s371 + $0x24] sm:$0xf]
          %v524 = vld [vmem:[%s371 + $0x28] sm:$0xf]
          %v525 = vld [vmem:[%s371 + $0x2c] sm:$0xf]
          %v526 = vld [vmem:[%s371 + $0x30] sm:$0xf]
          %v527 = vld [vmem:[%s371 + $0x34] sm:$0xf]
          %v528 = vld [vmem:[%s371 + $0x38] sm:$0xf]
          %v529 = vld [vmem:[%s371 + $0x3c] sm:$0xf]
          %v530 = vld [vmem:[#allocation12] sm:$0xf]
          %v531 = vld [vmem:[#allocation12 + $0x4] sm:$0xf]
          %v532 = vld [vmem:[#allocation12 + $0x8] sm:$0xf]
          %v533 = vld [vmem:[#allocation12 + $0xc] sm:$0xf]
          %v534 = vld [vmem:[#allocation12 + $0x10] sm:$0xf]
          %v535 = vld [vmem:[#allocation12 + $0x14] sm:$0xf]
          %v536 = vld [vmem:[#allocation12 + $0x18] sm:$0xf]
          %v537 = vld [vmem:[#allocation12 + $0x1c] sm:$0xf]
          %v538 = vld [vmem:[#allocation12 + $0x20] sm:$0xf]
          %v539 = vld [vmem:[#allocation12 + $0x24] sm:$0xf]
          %v540 = vld [vmem:[#allocation12 + $0x28] sm:$0xf]
          %v541 = vld [vmem:[#allocation12 + $0x2c] sm:$0xf]
          %v542 = vld [vmem:[#allocation12 + $0x30] sm:$0xf]
          %v543 = vld [vmem:[#allocation12 + $0x34] sm:$0xf]
          %v544 = vld [vmem:[#allocation12 + $0x38] sm:$0xf]
          %v545 = vld [vmem:[#allocation12 + $0x3c] sm:$0xf]
          %v546 = vld [vmem:[%s4] sm:$0x1]
          %v548 = vperm.slane %v546, 0
          %v566 = vunpack.c.l.b16 %v514
          %v567 = vunpack.c.l.b16 %v515
          %v568 = vunpack.c.l.b16 %v516
          %v569 = vunpack.c.l.b16 %v517
          %v570 = vunpack.c.l.b16 %v518
          %v571 = vunpack.c.l.b16 %v519
          %v572 = vunpack.c.l.b16 %v520
          %v573 = vunpack.c.l.b16 %v521
          %v574 = vunpack.c.l.b16 %v522
          %v575 = vunpack.c.l.b16 %v523
          %v576 = vunpack.c.l.b16 %v524
          %v577 = vunpack.c.l.b16 %v525
          %v578 = vunpack.c.l.b16 %v526
          %v579 = vunpack.c.l.b16 %v527
          %v580 = vunpack.c.l.b16 %v528
          %v581 = vunpack.c.l.b16 %v529
          %v582 = vpack.c.b16 %v567, %v566
          %v583 = vpack.c.b16 %v569, %v568
          %v584 = vpack.c.b16 %v571, %v570
          %v585 = vpack.c.b16 %v573, %v572
          %v586 = vpack.c.b16 %v575, %v574
          %v587 = vpack.c.b16 %v577, %v576
          %v588 = vpack.c.b16 %v579, %v578
          %v589 = vpack.c.b16 %v581, %v580
          %v614 = vunpack.c.l.b16 %v530
          %v615 = vunpack.c.l.b16 %v531
          %v616 = vunpack.c.l.b16 %v532
          %v617 = vunpack.c.l.b16 %v533
          %v618 = vunpack.c.l.b16 %v534
          %v619 = vunpack.c.l.b16 %v535
          %v620 = vunpack.c.l.b16 %v536
          %v621 = vunpack.c.l.b16 %v537
          %v622 = vunpack.c.l.b16 %v538
          %v623 = vunpack.c.l.b16 %v539
          %v624 = vunpack.c.l.b16 %v540
          %v625 = vunpack.c.l.b16 %v541
          %v626 = vunpack.c.l.b16 %v542
          %v627 = vunpack.c.l.b16 %v543
          %v628 = vunpack.c.l.b16 %v544
          %v629 = vunpack.c.l.b16 %v545
          %v630 = vpack.c.b16 %v615, %v614
          %v631 = vpack.c.b16 %v617, %v616
          %v632 = vpack.c.b16 %v619, %v618
          %v633 = vpack.c.b16 %v621, %v620
          %v634 = vpack.c.b16 %v623, %v622
          %v635 = vpack.c.b16 %v625, %v624
          %v636 = vpack.c.b16 %v627, %v626
          %v637 = vpack.c.b16 %v629, %v628
          %646 = vmatpush.bf16.msra.mxu0 %v637
          %647 = vmatpush.bf16.msra.mxu0 %v636
          %648 = vmatpush.bf16.msra.mxu0 %v635
          %649 = vmatpush.bf16.msra.mxu0 %v634
          %650 = vmatpush.bf16.msra.mxu0 %v633
          %651 = vmatpush.bf16.msra.mxu0 %v632
          %652 = vmatpush.bf16.msra.mxu0 %v631
          %653 = vmatpush.bf16.msra.mxu0 %v630
          %654 = vmatmul.bf16.gmra.mxu0 %v582
          %v655 = vpop.f32.mrf.mxu0
          %v656 = vadd.f32 %v548, %v655
          %v657 = vpop.f32.mrf.mxu0
          %v658 = vadd.f32 %v548, %v657
          %659 = vmatmul.bf16.gmra.mxu0 %v583
          %v660 = vpop.f32.mrf.mxu0
          %v661 = vadd.f32 %v548, %v660
          %v662 = vpop.f32.mrf.mxu0
          %v663 = vadd.f32 %v548, %v662
          %664 = vmatmul.bf16.gmra.mxu0 %v584
          %v665 = vpop.f32.mrf.mxu0
          %v666 = vadd.f32 %v548, %v665
          %v667 = vpop.f32.mrf.mxu0
          %v668 = vadd.f32 %v548, %v667
          %669 = vmatmul.bf16.gmra.mxu0 %v585
          %v670 = vpop.f32.mrf.mxu0
          %v671 = vadd.f32 %v548, %v670
          %v672 = vpop.f32.mrf.mxu0
          %v673 = vadd.f32 %v548, %v672
          %674 = vmatmul.bf16.gmra.mxu0 %v586
          %v675 = vpop.f32.mrf.mxu0
          %v676 = vadd.f32 %v548, %v675
          %v677 = vpop.f32.mrf.mxu0
          %v678 = vadd.f32 %v548, %v677
          %679 = vmatmul.bf16.gmra.mxu0 %v587
          %v680 = vpop.f32.mrf.mxu0
          %v681 = vadd.f32 %v548, %v680
          %v682 = vpop.f32.mrf.mxu0
          %v683 = vadd.f32 %v548, %v682
          %684 = vmatmul.bf16.gmra.mxu0 %v588
          %v685 = vpop.f32.mrf.mxu0
          %v686 = vadd.f32 %v548, %v685
          %v687 = vpop.f32.mrf.mxu0
          %v688 = vadd.f32 %v548, %v687
          %689 = vmatmul.bf16.gmra.mxu0 %v589
          %v690 = vpop.f32.mrf.mxu0
          %v691 = vadd.f32 %v548, %v690
          %v692 = vpop.f32.mrf.mxu0
          %v693 = vadd.f32 %v548, %v692
          %694 = vdwg.mxu0
          %v695 = vsel %vm489, 1, 0
          %v696 = vsel %vm490, 1, 0
          %v697 = vsel %vm491, 1, 0
          %v698 = vsel %vm492, 1, 0
          %v699 = vsel %vm493, 1, 0
          %v700 = vsel %vm494, 1, 0
          %v701 = vsel %vm495, 1, 0
          %v702 = vsel %vm496, 1, 0
          %v703 = vsel %vm497, 1, 0
          %v704 = vsel %vm498, 1, 0
          %v705 = vsel %vm499, 1, 0
          %v706 = vsel %vm500, 1, 0
          %v707 = vsel %vm501, 1, 0
          %v708 = vsel %vm502, 1, 0
          %v709 = vsel %vm503, 1, 0
          %v710 = vsel %vm504, 1, 0
          %vm711 = vcmp.eq.s32.totalorder %v695, 1
          %vm712 = vcmp.eq.s32.totalorder %v696, 1
          %vm713 = vcmp.eq.s32.totalorder %v697, 1
          %vm714 = vcmp.eq.s32.totalorder %v698, 1
          %vm715 = vcmp.eq.s32.totalorder %v699, 1
          %vm716 = vcmp.eq.s32.totalorder %v700, 1
          %vm717 = vcmp.eq.s32.totalorder %v701, 1
          %vm718 = vcmp.eq.s32.totalorder %v702, 1
          %vm719 = vcmp.eq.s32.totalorder %v703, 1
          %vm720 = vcmp.eq.s32.totalorder %v704, 1
          %vm721 = vcmp.eq.s32.totalorder %v705, 1
          %vm722 = vcmp.eq.s32.totalorder %v706, 1
          %vm723 = vcmp.eq.s32.totalorder %v707, 1
          %vm724 = vcmp.eq.s32.totalorder %v708, 1
          %vm725 = vcmp.eq.s32.totalorder %v709, 1
          %vm726 = vcmp.eq.s32.totalorder %v710, 1
          %v727 = vsel %vm711, %v656, 0.0
          %v728 = vsel %vm712, %v658, 0.0
          %v729 = vsel %vm713, %v661, 0.0
          %v730 = vsel %vm714, %v663, 0.0
          %v731 = vsel %vm715, %v666, 0.0
          %v732 = vsel %vm716, %v668, 0.0
          %v733 = vsel %vm717, %v671, 0.0
          %v734 = vsel %vm718, %v673, 0.0
          %v735 = vsel %vm719, %v676, 0.0
          %v736 = vsel %vm720, %v678, 0.0
          %v737 = vsel %vm721, %v681, 0.0
          %v738 = vsel %vm722, %v683, 0.0
          %v739 = vsel %vm723, %v686, 0.0
          %v740 = vsel %vm724, %v688, 0.0
          %v741 = vsel %vm725, %v691, 0.0
          %v742 = vsel %vm726, %v693, 0.0
          %s743 = scalar_lea.vmem [#allocation2], %s454
          %744 = vst [vmem:[%s743] sm:$0xff] %v727
          %745 = vst [vmem:[%s743 + $0x8] sm:$0xff] %v728
          %746 = vst [vmem:[%s743 + $0x10] sm:$0xff] %v729
          %747 = vst [vmem:[%s743 + $0x18] sm:$0xff] %v730
          %748 = vst [vmem:[%s743 + $0x20] sm:$0xff] %v731
          %749 = vst [vmem:[%s743 + $0x28] sm:$0xff] %v732
          %750 = vst [vmem:[%s743 + $0x30] sm:$0xff] %v733
          %751 = vst [vmem:[%s743 + $0x38] sm:$0xff] %v734
          %752 = vst [vmem:[%s743 + $0x40] sm:$0xff] %v735
          %753 = vst [vmem:[%s743 + $0x48] sm:$0xff] %v736
          %754 = vst [vmem:[%s743 + $0x50] sm:$0xff] %v737
          %755 = vst [vmem:[%s743 + $0x58] sm:$0xff] %v738
          %756 = vst [vmem:[%s743 + $0x60] sm:$0xff] %v739
          %757 = vst [vmem:[%s743 + $0x68] sm:$0xff] %v740
          %758 = vst [vmem:[%s743 + $0x70] sm:$0xff] %v741
          %759 = vst [vmem:[%s743 + $0x78] sm:$0xff] %v742
          %v760 = vld [vmem:[#allocation4] sm:$0x1]
          %v761 = vadd.f32 %v727, %v728
          %v762 = vadd.f32 %v761, %v729
          %v763 = vadd.f32 %v762, %v730
          %v764 = vadd.f32 %v763, %v731
          %v765 = vadd.f32 %v764, %v732
          %v766 = vadd.f32 %v765, %v733
          %v767 = vadd.f32 %v766, %v734
          %v768 = vadd.f32 %v767, %v735
          %v769 = vadd.f32 %v768, %v736
          %v770 = vadd.f32 %v769, %v737
          %v771 = vadd.f32 %v770, %v738
          %v772 = vadd.f32 %v771, %v739
          %v773 = vadd.f32 %v772, %v740
          %v774 = vadd.f32 %v773, %v741
          %v775 = vadd.f32 %v774, %v742
          %v776 = vrot.slane %v775, 4
          %v777 = vadd.f32 %v775, %v776
          %v778 = vrot.slane %v777, 2
          %v779 = vadd.f32 %v777, %v778
          %v780 = vrot.slane %v779, 1
          %v781 = vadd.f32 %v779, %v780
          %v782 = vadd.f32 %v760, %v781
          %783 = vst [vmem:[#allocation4] sm:$0x1] %v782
        $region76: #{tpu_custom_call.1} parent=47 // pred_fallthru
          _
        %p784 = scmp.gt.s32.totalorder %s30, 0
        // Predicated region
        $region77: #{tpu_custom_call.1} parent=47 // pred_check
          %p785 = pneg %p784
        $region78: #{tpu_custom_call.1} parent=47 // pred_check_branch
          %787 = sbr.rel (%p785) target = $region80
        $region79: #{tpu_custom_call.1} parent=47 // pred_region
          %s788 = sshra.s32 %s454, 3
          %s789 = sand.u32 %s454, 7
          %s790 = smul.u32 %s788, 2
          %s791 = smul.addr %s790, 4
          %s792 = scalar_lea.vmem [#allocation9], %s791
          %v793 = vld [vmem:[%s792] sm:$0xff]
          %v794 = vld [vmem:[%s792 + $0x8] sm:$0xff]
          %v795 = vld [vmem:[%s792 + $0x10] sm:$0xff]
          %v796 = vld [vmem:[%s792 + $0x18] sm:$0xff]
          %v797 = vld [vmem:[%s792 + $0x20] sm:$0xff]
          %v798 = vld [vmem:[%s792 + $0x28] sm:$0xff]
          %v799 = vld [vmem:[%s792 + $0x30] sm:$0xff]
          %v800 = vld [vmem:[%s792 + $0x38] sm:$0xff]
          %v801 = vld [vmem:[%s792 + $0x40] sm:$0xff]
          %v802 = vld [vmem:[%s792 + $0x48] sm:$0xff]
          %v803 = vld [vmem:[%s792 + $0x50] sm:$0xff]
          %v804 = vld [vmem:[%s792 + $0x58] sm:$0xff]
          %v805 = vld [vmem:[%s792 + $0x60] sm:$0xff]
          %v806 = vld [vmem:[%s792 + $0x68] sm:$0xff]
          %v807 = vld [vmem:[%s792 + $0x70] sm:$0xff]
          %v808 = vld [vmem:[%s792 + $0x78] sm:$0xff]
          %s809 = scalar_lea.vmem [#allocation2], %s454
          %v810 = vld [vmem:[%s809] sm:$0xff]
          %v811 = vld [vmem:[%s809 + $0x8] sm:$0xff]
          %v812 = vld [vmem:[%s809 + $0x10] sm:$0xff]
          %v813 = vld [vmem:[%s809 + $0x18] sm:$0xff]
          %v814 = vld [vmem:[%s809 + $0x20] sm:$0xff]
          %v815 = vld [vmem:[%s809 + $0x28] sm:$0xff]
          %v816 = vld [vmem:[%s809 + $0x30] sm:$0xff]
          %v817 = vld [vmem:[%s809 + $0x38] sm:$0xff]
          %v818 = vld [vmem:[%s809 + $0x40] sm:$0xff]
          %v819 = vld [vmem:[%s809 + $0x48] sm:$0xff]
          %v820 = vld [vmem:[%s809 + $0x50] sm:$0xff]
          %v821 = vld [vmem:[%s809 + $0x58] sm:$0xff]
          %v822 = vld [vmem:[%s809 + $0x60] sm:$0xff]
          %v823 = vld [vmem:[%s809 + $0x68] sm:$0xff]
          %v824 = vld [vmem:[%s809 + $0x70] sm:$0xff]
          %v825 = vld [vmem:[%s809 + $0x78] sm:$0xff]
          %v826 = vld [vmem:[#allocation3] sm:$0xf]
          %v827 = vld [vmem:[#allocation3 + $0x4] sm:$0xf]
          %v828 = vld [vmem:[#allocation3 + $0x8] sm:$0xf]
          %v829 = vld [vmem:[#allocation3 + $0xc] sm:$0xf]
          %v830 = vld [vmem:[#allocation3 + $0x10] sm:$0xf]
          %v831 = vld [vmem:[#allocation3 + $0x14] sm:$0xf]
          %v832 = vld [vmem:[#allocation3 + $0x18] sm:$0xf]
          %v833 = vld [vmem:[#allocation3 + $0x1c] sm:$0xf]
          %v834 = vld [vmem:[#allocation3 + $0x20] sm:$0xf]
          %v835 = vld [vmem:[#allocation3 + $0x24] sm:$0xf]
          %v836 = vld [vmem:[#allocation3 + $0x28] sm:$0xf]
          %v837 = vld [vmem:[#allocation3 + $0x2c] sm:$0xf]
          %v838 = vld [vmem:[#allocation3 + $0x30] sm:$0xf]
          %v839 = vld [vmem:[#allocation3 + $0x34] sm:$0xf]
          %v840 = vld [vmem:[#allocation3 + $0x38] sm:$0xf]
          %v841 = vld [vmem:[#allocation3 + $0x3c] sm:$0xf]
          %v842 = vld [vmem:[#allocation3 + $0x40] sm:$0xf]
          %v843 = vld [vmem:[#allocation3 + $0x44] sm:$0xf]
          %v844 = vld [vmem:[#allocation3 + $0x48] sm:$0xf]
          %v845 = vld [vmem:[#allocation3 + $0x4c] sm:$0xf]
          %v846 = vld [vmem:[#allocation3 + $0x50] sm:$0xf]
          %v847 = vld [vmem:[#allocation3 + $0x54] sm:$0xf]
          %v848 = vld [vmem:[#allocation3 + $0x58] sm:$0xf]
          %v849 = vld [vmem:[#allocation3 + $0x5c] sm:$0xf]
          %v850 = vld [vmem:[#allocation3 + $0x60] sm:$0xf]
          %v851 = vld [vmem:[#allocation3 + $0x64] sm:$0xf]
          %v852 = vld [vmem:[#allocation3 + $0x68] sm:$0xf]
          %v853 = vld [vmem:[#allocation3 + $0x6c] sm:$0xf]
          %v854 = vld [vmem:[#allocation3 + $0x70] sm:$0xf]
          %v855 = vld [vmem:[#allocation3 + $0x74] sm:$0xf]
          %v856 = vld [vmem:[#allocation3 + $0x78] sm:$0xf]
          %v857 = vld [vmem:[#allocation3 + $0x7c] sm:$0xf]
          %v874 = vunpack.c.l.b16 %v793
          %v875 = vunpack.c.h.b16 %v793
          %v876 = vunpack.c.l.b16 %v794
          %v877 = vunpack.c.h.b16 %v794
          %v878 = vunpack.c.l.b16 %v795
          %v879 = vunpack.c.h.b16 %v795
          %v880 = vunpack.c.l.b16 %v796
          %v881 = vunpack.c.h.b16 %v796
          %v882 = vunpack.c.l.b16 %v797
          %v883 = vunpack.c.h.b16 %v797
          %v884 = vunpack.c.l.b16 %v798
          %v885 = vunpack.c.h.b16 %v798
          %v886 = vunpack.c.l.b16 %v799
          %v887 = vunpack.c.h.b16 %v799
          %v888 = vunpack.c.l.b16 %v800
          %v889 = vunpack.c.h.b16 %v800
          %v890 = vunpack.c.l.b16 %v801
          %v891 = vunpack.c.h.b16 %v801
          %v892 = vunpack.c.l.b16 %v802
          %v893 = vunpack.c.h.b16 %v802
          %v894 = vunpack.c.l.b16 %v803
          %v895 = vunpack.c.h.b16 %v803
          %v896 = vunpack.c.l.b16 %v804
          %v897 = vunpack.c.h.b16 %v804
          %v898 = vunpack.c.l.b16 %v805
          %v899 = vunpack.c.h.b16 %v805
          %v900 = vunpack.c.l.b16 %v806
          %v901 = vunpack.c.h.b16 %v806
          %v902 = vunpack.c.l.b16 %v807
          %v903 = vunpack.c.h.b16 %v807
          %v904 = vunpack.c.l.b16 %v808
          %v905 = vunpack.c.h.b16 %v808
          %v906 = vpack.c.b16 %v876, %v874
          %v907 = vpack.c.b16 %v877, %v875
          %v908 = vpack.c.b16 %v880, %v878
          %v909 = vpack.c.b16 %v881, %v879
          %v910 = vpack.c.b16 %v884, %v882
          %v911 = vpack.c.b16 %v885, %v883
          %v912 = vpack.c.b16 %v888, %v886
          %v913 = vpack.c.b16 %v889, %v887
          %v914 = vpack.c.b16 %v892, %v890
          %v915 = vpack.c.b16 %v893, %v891
          %v916 = vpack.c.b16 %v896, %v894
          %v917 = vpack.c.b16 %v897, %v895
          %v918 = vpack.c.b16 %v900, %v898
          %v919 = vpack.c.b16 %v901, %v899
          %v920 = vpack.c.b16 %v904, %v902
          %v921 = vpack.c.b16 %v905, %v903
          %v970 = vunpack.c.l.b16 %v826
          %v971 = vunpack.c.l.b16 %v827
          %v972 = vunpack.c.l.b16 %v828
          %v973 = vunpack.c.l.b16 %v829
          %v974 = vunpack.c.l.b16 %v830
          %v975 = vunpack.c.l.b16 %v831
          %v976 = vunpack.c.l.b16 %v832
          %v977 = vunpack.c.l.b16 %v833
          %v978 = vunpack.c.l.b16 %v834
          %v979 = vunpack.c.l.b16 %v835
          %v980 = vunpack.c.l.b16 %v836
          %v981 = vunpack.c.l.b16 %v837
          %v982 = vunpack.c.l.b16 %v838
          %v983 = vunpack.c.l.b16 %v839
          %v984 = vunpack.c.l.b16 %v840
          %v985 = vunpack.c.l.b16 %v841
          %v986 = vunpack.c.l.b16 %v842
          %v987 = vunpack.c.l.b16 %v843
          %v988 = vunpack.c.l.b16 %v844
          %v989 = vunpack.c.l.b16 %v845
          %v990 = vunpack.c.l.b16 %v846
          %v991 = vunpack.c.l.b16 %v847
          %v992 = vunpack.c.l.b16 %v848
          %v993 = vunpack.c.l.b16 %v849
          %v994 = vunpack.c.l.b16 %v850
          %v995 = vunpack.c.l.b16 %v851
          %v996 = vunpack.c.l.b16 %v852
          %v997 = vunpack.c.l.b16 %v853
          %v998 = vunpack.c.l.b16 %v854
          %v999 = vunpack.c.l.b16 %v855
          %v1000 = vunpack.c.l.b16 %v856
          %v1001 = vunpack.c.l.b16 %v857
          %v1002 = vpack.c.b16 %v971, %v970
          %v1003 = vpack.c.b16 %v973, %v972
          %v1004 = vpack.c.b16 %v975, %v974
          %v1005 = vpack.c.b16 %v977, %v976
          %v1006 = vpack.c.b16 %v979, %v978
          %v1007 = vpack.c.b16 %v981, %v980
          %v1008 = vpack.c.b16 %v983, %v982
          %v1009 = vpack.c.b16 %v985, %v984
          %v1010 = vpack.c.b16 %v987, %v986
          %v1011 = vpack.c.b16 %v989, %v988
          %v1012 = vpack.c.b16 %v991, %v990
          %v1013 = vpack.c.b16 %v993, %v992
          %v1014 = vpack.c.b16 %v995, %v994
          %v1015 = vpack.c.b16 %v997, %v996
          %v1016 = vpack.c.b16 %v999, %v998
          %v1017 = vpack.c.b16 %v1001, %v1000
          %1034 = vmatpush.bf16.msra.mxu0 %v1009
          %1035 = vmatpush.bf16.msra.mxu0 %v1008
          %1036 = vmatpush.bf16.msra.mxu0 %v1007
          %1037 = vmatpush.bf16.msra.mxu0 %v1006
          %1038 = vmatpush.bf16.msra.mxu0 %v1005
          %1039 = vmatpush.bf16.msra.mxu0 %v1004
          %1040 = vmatpush.bf16.msra.mxu0 %v1003
          %1041 = vmatpush.bf16.msra.mxu0 %v1002
          %1042 = vmatmul.bf16.gmra.mxu0 %v906
          %v1043 = vpop.f32.mrf.mxu0
          %v1044 = vadd.f32 0.0, %v1043
          %v1045 = vpop.f32.mrf.mxu0
          %v1046 = vadd.f32 0.0, %v1045
          %1047 = vmatmul.bf16.gmra.mxu0 %v908
          %v1048 = vpop.f32.mrf.mxu0
          %v1049 = vadd.f32 0.0, %v1048
          %v1050 = vpop.f32.mrf.mxu0
          %v1051 = vadd.f32 0.0, %v1050
          %1052 = vmatmul.bf16.gmra.mxu0 %v910
          %v1053 = vpop.f32.mrf.mxu0
          %v1054 = vadd.f32 0.0, %v1053
          %v1055 = vpop.f32.mrf.mxu0
          %v1056 = vadd.f32 0.0, %v1055
          %1057 = vmatmul.bf16.gmra.mxu0 %v912
          %v1058 = vpop.f32.mrf.mxu0
          %v1059 = vadd.f32 0.0, %v1058
          %v1060 = vpop.f32.mrf.mxu0
          %v1061 = vadd.f32 0.0, %v1060
          %1062 = vmatmul.bf16.gmra.mxu0 %v914
          %v1063 = vpop.f32.mrf.mxu0
          %v1064 = vadd.f32 0.0, %v1063
          %v1065 = vpop.f32.mrf.mxu0
          %v1066 = vadd.f32 0.0, %v1065
          %1067 = vmatmul.bf16.gmra.mxu0 %v916
          %v1068 = vpop.f32.mrf.mxu0
          %v1069 = vadd.f32 0.0, %v1068
          %v1070 = vpop.f32.mrf.mxu0
          %v1071 = vadd.f32 0.0, %v1070
          %1072 = vmatmul.bf16.gmra.mxu0 %v918
          %v1073 = vpop.f32.mrf.mxu0
          %v1074 = vadd.f32 0.0, %v1073
          %v1075 = vpop.f32.mrf.mxu0
          %v1076 = vadd.f32 0.0, %v1075
          %1077 = vmatmul.bf16.gmra.mxu0 %v920
          %v1078 = vpop.f32.mrf.mxu0
          %v1079 = vadd.f32 0.0, %v1078
          %v1080 = vpop.f32.mrf.mxu0
          %v1081 = vadd.f32 0.0, %v1080
          %1082 = vdwg.mxu0
          %1083 = vmatpush.bf16.msra.mxu0 %v1017
          %1084 = vmatpush.bf16.msra.mxu0 %v1016
          %1085 = vmatpush.bf16.msra.mxu0 %v1015
          %1086 = vmatpush.bf16.msra.mxu0 %v1014
          %1087 = vmatpush.bf16.msra.mxu0 %v1013
          %1088 = vmatpush.bf16.msra.mxu0 %v1012
          %1089 = vmatpush.bf16.msra.mxu0 %v1011
          %1090 = vmatpush.bf16.msra.mxu0 %v1010
          %1091 = vmatmul.bf16.gmra.mxu0 %v907
          %v1092 = vpop.f32.mrf.mxu0
          %v1093 = vadd.f32 %v1044, %v1092
          %v1094 = vpop.f32.mrf.mxu0
          %v1095 = vadd.f32 %v1046, %v1094
          %1096 = vmatmul.bf16.gmra.mxu0 %v909
          %v1097 = vpop.f32.mrf.mxu0
          %v1098 = vadd.f32 %v1049, %v1097
          %v1099 = vpop.f32.mrf.mxu0
          %v1100 = vadd.f32 %v1051, %v1099
          %1101 = vmatmul.bf16.gmra.mxu0 %v911
          %v1102 = vpop.f32.mrf.mxu0
          %v1103 = vadd.f32 %v1054, %v1102
          %v1104 = vpop.f32.mrf.mxu0
          %v1105 = vadd.f32 %v1056, %v1104
          %1106 = vmatmul.bf16.gmra.mxu0 %v913
          %v1107 = vpop.f32.mrf.mxu0
          %v1108 = vadd.f32 %v1059, %v1107
          %v1109 = vpop.f32.mrf.mxu0
          %v1110 = vadd.f32 %v1061, %v1109
          %1111 = vmatmul.bf16.gmra.mxu0 %v915
          %v1112 = vpop.f32.mrf.mxu0
          %v1113 = vadd.f32 %v1064, %v1112
          %v1114 = vpop.f32.mrf.mxu0
          %v1115 = vadd.f32 %v1066, %v1114
          %1116 = vmatmul.bf16.gmra.mxu0 %v917
          %v1117 = vpop.f32.mrf.mxu0
          %v1118 = vadd.f32 %v1069, %v1117
          %v1119 = vpop.f32.mrf.mxu0
          %v1120 = vadd.f32 %v1071, %v1119
          %1121 = vmatmul.bf16.gmra.mxu0 %v919
          %v1122 = vpop.f32.mrf.mxu0
          %v1123 = vadd.f32 %v1074, %v1122
          %v1124 = vpop.f32.mrf.mxu0
          %v1125 = vadd.f32 %v1076, %v1124
          %1126 = vmatmul.bf16.gmra.mxu0 %v921
          %v1127 = vpop.f32.mrf.mxu0
          %v1128 = vadd.f32 %v1079, %v1127
          %v1129 = vpop.f32.mrf.mxu0
          %v1130 = vadd.f32 %v1081, %v1129
          %1131 = vdwg.mxu0
          %v1132 = vadd.f32 %v810, %v1093
          %v1133 = vadd.f32 %v811, %v1095
          %v1134 = vadd.f32 %v812, %v1098
          %v1135 = vadd.f32 %v813, %v1100
          %v1136 = vadd.f32 %v814, %v1103
          %v1137 = vadd.f32 %v815, %v1105
          %v1138 = vadd.f32 %v816, %v1108
          %v1139 = vadd.f32 %v817, %v1110
          %v1140 = vadd.f32 %v818, %v1113
          %v1141 = vadd.f32 %v819, %v1115
          %v1142 = vadd.f32 %v820, %v1118
          %v1143 = vadd.f32 %v821, %v1120
          %v1144 = vadd.f32 %v822, %v1123
          %v1145 = vadd.f32 %v823, %v1125
          %v1146 = vadd.f32 %v824, %v1128
          %v1147 = vadd.f32 %v825, %v1130
          %v1148 = vpack.c.bf16 %v1133, %v1132
          %v1149 = vpack.c.bf16 %v1135, %v1134
          %v1150 = vpack.c.bf16 %v1137, %v1136
          %v1151 = vpack.c.bf16 %v1139, %v1138
          %v1152 = vpack.c.bf16 %v1141, %v1140
          %v1153 = vpack.c.bf16 %v1143, %v1142
          %v1154 = vpack.c.bf16 %v1145, %v1144
          %v1155 = vpack.c.bf16 %v1147, %v1146
          %v1156 = vld [vmem:[%s396] sm:$0xf]
          %v1157 = vld [vmem:[%s396 + $0x4] sm:$0xf]
          %v1158 = vld [vmem:[%s396 + $0x8] sm:$0xf]
          %v1159 = vld [vmem:[%s396 + $0xc] sm:$0xf]
          %v1160 = vld [vmem:[%s396 + $0x10] sm:$0xf]
          %v1161 = vld [vmem:[%s396 + $0x14] sm:$0xf]
          %v1162 = vld [vmem:[%s396 + $0x18] sm:$0xf]
          %v1163 = vld [vmem:[%s396 + $0x1c] sm:$0xf]
          %v1164 = vld [vmem:[%s396 + $0x20] sm:$0xf]
          %v1165 = vld [vmem:[%s396 + $0x24] sm:$0xf]
          %v1166 = vld [vmem:[%s396 + $0x28] sm:$0xf]
          %v1167 = vld [vmem:[%s396 + $0x2c] sm:$0xf]
          %v1168 = vld [vmem:[%s396 + $0x30] sm:$0xf]
          %v1169 = vld [vmem:[%s396 + $0x34] sm:$0xf]
          %v1170 = vld [vmem:[%s396 + $0x38] sm:$0xf]
          %v1171 = vld [vmem:[%s396 + $0x3c] sm:$0xf]
          %v1172 = vld [vmem:[%s450] sm:$0x1]
          %v1174 = vperm.slane %v1172, 0
          %v1192 = vunpack.c.l.b16 %v1156
          %v1193 = vunpack.c.l.b16 %v1157
          %v1194 = vunpack.c.l.b16 %v1158
          %v1195 = vunpack.c.l.b16 %v1159
          %v1196 = vunpack.c.l.b16 %v1160
          %v1197 = vunpack.c.l.b16 %v1161
          %v1198 = vunpack.c.l.b16 %v1162
          %v1199 = vunpack.c.l.b16 %v1163
          %v1200 = vunpack.c.l.b16 %v1164
          %v1201 = vunpack.c.l.b16 %v1165
          %v1202 = vunpack.c.l.b16 %v1166
          %v1203 = vunpack.c.l.b16 %v1167
          %v1204 = vunpack.c.l.b16 %v1168
          %v1205 = vunpack.c.l.b16 %v1169
          %v1206 = vunpack.c.l.b16 %v1170
          %v1207 = vunpack.c.l.b16 %v1171
          %v1208 = vpack.c.b16 %v1193, %v1192
          %v1209 = vpack.c.b16 %v1195, %v1194
          %v1210 = vpack.c.b16 %v1197, %v1196
          %v1211 = vpack.c.b16 %v1199, %v1198
          %v1212 = vpack.c.b16 %v1201, %v1200
          %v1213 = vpack.c.b16 %v1203, %v1202
          %v1214 = vpack.c.b16 %v1205, %v1204
          %v1215 = vpack.c.b16 %v1207, %v1206
          %1224 = vmatpush.bf16.msra.mxu0 %v1215
          %1225 = vmatpush.bf16.msra.mxu0 %v1214
          %1226 = vmatpush.bf16.msra.mxu0 %v1213
          %1227 = vmatpush.bf16.msra.mxu0 %v1212
          %1228 = vmatpush.bf16.msra.mxu0 %v1211
          %1229 = vmatpush.bf16.msra.mxu0 %v1210
          %1230 = vmatpush.bf16.msra.mxu0 %v1209
          %1231 = vmatpush.bf16.msra.mxu0 %v1208
          %1232 = vmatmul.bf16.gmra.mxu0 %v1148
          %v1233 = vpop.f32.mrf.mxu0
          %v1234 = vadd.f32 %v1174, %v1233
          %v1235 = vpop.f32.mrf.mxu0
          %v1236 = vadd.f32 %v1174, %v1235
          %1237 = vmatmul.bf16.gmra.mxu0 %v1149
          %v1238 = vpop.f32.mrf.mxu0
          %v1239 = vadd.f32 %v1174, %v1238
          %v1240 = vpop.f32.mrf.mxu0
          %v1241 = vadd.f32 %v1174, %v1240
          %1242 = vmatmul.bf16.gmra.mxu0 %v1150
          %v1243 = vpop.f32.mrf.mxu0
          %v1244 = vadd.f32 %v1174, %v1243
          %v1245 = vpop.f32.mrf.mxu0
          %v1246 = vadd.f32 %v1174, %v1245
          %1247 = vmatmul.bf16.gmra.mxu0 %v1151
          %v1248 = vpop.f32.mrf.mxu0
          %v1249 = vadd.f32 %v1174, %v1248
          %v1250 = vpop.f32.mrf.mxu0
          %v1251 = vadd.f32 %v1174, %v1250
          %1252 = vmatmul.bf16.gmra.mxu0 %v1152
          %v1253 = vpop.f32.mrf.mxu0
          %v1254 = vadd.f32 %v1174, %v1253
          %v1255 = vpop.f32.mrf.mxu0
          %v1256 = vadd.f32 %v1174, %v1255
          %1257 = vmatmul.bf16.gmra.mxu0 %v1153
          %v1258 = vpop.f32.mrf.mxu0
          %v1259 = vadd.f32 %v1174, %v1258
          %v1260 = vpop.f32.mrf.mxu0
          %v1261 = vadd.f32 %v1174, %v1260
          %1262 = vmatmul.bf16.gmra.mxu0 %v1154
          %v1263 = vpop.f32.mrf.mxu0
          %v1264 = vadd.f32 %v1174, %v1263
          %v1265 = vpop.f32.mrf.mxu0
          %v1266 = vadd.f32 %v1174, %v1265
          %1267 = vmatmul.bf16.gmra.mxu0 %v1155
          %v1268 = vpop.f32.mrf.mxu0
          %v1269 = vadd.f32 %v1174, %v1268
          %v1270 = vpop.f32.mrf.mxu0
          %v1271 = vadd.f32 %v1174, %v1270
          %1272 = vdwg.mxu0
          %v1273 = vsel %vm489, 1, 0
          %v1274 = vsel %vm490, 1, 0
          %v1275 = vsel %vm491, 1, 0
          %v1276 = vsel %vm492, 1, 0
          %v1277 = vsel %vm493, 1, 0
          %v1278 = vsel %vm494, 1, 0
          %v1279 = vsel %vm495, 1, 0
          %v1280 = vsel %vm496, 1, 0
          %v1281 = vsel %vm497, 1, 0
          %v1282 = vsel %vm498, 1, 0
          %v1283 = vsel %vm499, 1, 0
          %v1284 = vsel %vm500, 1, 0
          %v1285 = vsel %vm501, 1, 0
          %v1286 = vsel %vm502, 1, 0
          %v1287 = vsel %vm503, 1, 0
          %v1288 = vsel %vm504, 1, 0
          %vm1289 = vcmp.eq.s32.totalorder %v1273, 1
          %vm1290 = vcmp.eq.s32.totalorder %v1274, 1
          %vm1291 = vcmp.eq.s32.totalorder %v1275, 1
          %vm1292 = vcmp.eq.s32.totalorder %v1276, 1
          %vm1293 = vcmp.eq.s32.totalorder %v1277, 1
          %vm1294 = vcmp.eq.s32.totalorder %v1278, 1
          %vm1295 = vcmp.eq.s32.totalorder %v1279, 1
          %vm1296 = vcmp.eq.s32.totalorder %v1280, 1
          %vm1297 = vcmp.eq.s32.totalorder %v1281, 1
          %vm1298 = vcmp.eq.s32.totalorder %v1282, 1
          %vm1299 = vcmp.eq.s32.totalorder %v1283, 1
          %vm1300 = vcmp.eq.s32.totalorder %v1284, 1
          %vm1301 = vcmp.eq.s32.totalorder %v1285, 1
          %vm1302 = vcmp.eq.s32.totalorder %v1286, 1
          %vm1303 = vcmp.eq.s32.totalorder %v1287, 1
          %vm1304 = vcmp.eq.s32.totalorder %v1288, 1
          %v1305 = vsel %vm1289, %v1234, 0.0
          %v1306 = vsel %vm1290, %v1236, 0.0
          %v1307 = vsel %vm1291, %v1239, 0.0
          %v1308 = vsel %vm1292, %v1241, 0.0
          %v1309 = vsel %vm1293, %v1244, 0.0
          %v1310 = vsel %vm1294, %v1246, 0.0
          %v1311 = vsel %vm1295, %v1249, 0.0
          %v1312 = vsel %vm1296, %v1251, 0.0
          %v1313 = vsel %vm1297, %v1254, 0.0
          %v1314 = vsel %vm1298, %v1256, 0.0
          %v1315 = vsel %vm1299, %v1259, 0.0
          %v1316 = vsel %vm1300, %v1261, 0.0
          %v1317 = vsel %vm1301, %v1264, 0.0
          %v1318 = vsel %vm1302, %v1266, 0.0
          %v1319 = vsel %vm1303, %v1269, 0.0
          %v1320 = vsel %vm1304, %v1271, 0.0
          %1321 = vst [vmem:[%s809] sm:$0xff] %v1305
          %1322 = vst [vmem:[%s809 + $0x8] sm:$0xff] %v1306
          %1323 = vst [vmem:[%s809 + $0x10] sm:$0xff] %v1307
          %1324 = vst [vmem:[%s809 + $0x18] sm:$0xff] %v1308
          %1325 = vst [vmem:[%s809 + $0x20] sm:$0xff] %v1309
          %1326 = vst [vmem:[%s809 + $0x28] sm:$0xff] %v1310
          %1327 = vst [vmem:[%s809 + $0x30] sm:$0xff] %v1311
          %1328 = vst [vmem:[%s809 + $0x38] sm:$0xff] %v1312
          %1329 = vst [vmem:[%s809 + $0x40] sm:$0xff] %v1313
          %1330 = vst [vmem:[%s809 + $0x48] sm:$0xff] %v1314
          %1331 = vst [vmem:[%s809 + $0x50] sm:$0xff] %v1315
          %1332 = vst [vmem:[%s809 + $0x58] sm:$0xff] %v1316
          %1333 = vst [vmem:[%s809 + $0x60] sm:$0xff] %v1317
          %1334 = vst [vmem:[%s809 + $0x68] sm:$0xff] %v1318
          %1335 = vst [vmem:[%s809 + $0x70] sm:$0xff] %v1319
          %1336 = vst [vmem:[%s809 + $0x78] sm:$0xff] %v1320
          %v1337 = vld [vmem:[#allocation4] sm:$0x1]
          %v1338 = vadd.f32 %v1305, %v1306
          %v1339 = vadd.f32 %v1338, %v1307
          %v1340 = vadd.f32 %v1339, %v1308
          %v1341 = vadd.f32 %v1340, %v1309
          %v1342 = vadd.f32 %v1341, %v1310
          %v1343 = vadd.f32 %v1342, %v1311
          %v1344 = vadd.f32 %v1343, %v1312
          %v1345 = vadd.f32 %v1344, %v1313
          %v1346 = vadd.f32 %v1345, %v1314
          %v1347 = vadd.f32 %v1346, %v1315
          %v1348 = vadd.f32 %v1347, %v1316
          %v1349 = vadd.f32 %v1348, %v1317
          %v1350 = vadd.f32 %v1349, %v1318
          %v1351 = vadd.f32 %v1350, %v1319
          %v1352 = vadd.f32 %v1351, %v1320
          %v1353 = vrot.slane %v1352, 4
          %v1354 = vadd.f32 %v1352, %v1353
          %v1355 = vrot.slane %v1354, 2
          %v1356 = vadd.f32 %v1354, %v1355
          %v1357 = vrot.slane %v1356, 1
          %v1358 = vadd.f32 %v1356, %v1357
          %v1359 = vadd.f32 %v1337, %v1358
          %1360 = vst [vmem:[#allocation4] sm:$0x1] %v1359
        $region80: #{tpu_custom_call.1} parent=47 // pred_fallthru
          _
        %p1361 = scmp.eq.s32.totalorder %s31, 1
        // Predicated region
        $region81: #{tpu_custom_call.1} parent=47 // pred_check
          %p1362 = pneg %p1361
        $region82: #{tpu_custom_call.1} parent=47 // pred_check_branch
          %1364 = sbr.rel (%p1362) target = $region84
        $region83: #{tpu_custom_call.1} parent=47 // pred_region
          %v1365 = vld [vmem:[#allocation4] sm:$0x1]
          %v1366 = vmul.f32 %v1365, 0.00390625
          %1367 = vst [vmem:[#allocation5] sm:$0x1] 0.0
          loop: start=0, step=1, limit=2
          $region85: #{tpu_custom_call.1} parent=83 // loop_pre_header
            _
          $region86: #{tpu_custom_call.1} parent=83 // loop_header
            %s1369 = sphi 0, %s1373
            %p1370 = scmp.ge.s32.totalorder %s1369, 2
          $region87: #{tpu_custom_call.1} parent=83 // loop_header_branch
            %1372 = sbr.rel (%p1370) target = $region91
          $region88: #{tpu_custom_call.1} parent=83 // loop_body
            %s1374 = smul.u32 %s1369, 128
            %v1375 = vstv %s1374
            %v1376 = vadd.s32 %v1375, %v456
            %v1377 = vadd.s32 %v1375, %v457
            %v1378 = vadd.s32 %v1375, %v458
            %v1379 = vadd.s32 %v1375, %v459
            %v1380 = vadd.s32 %v1375, %v460
            %v1381 = vadd.s32 %v1375, %v461
            %v1382 = vadd.s32 %v1375, %v462
            %v1383 = vadd.s32 %v1375, %v463
            %v1384 = vadd.s32 %v1375, %v464
            %v1385 = vadd.s32 %v1375, %v465
            %v1386 = vadd.s32 %v1375, %v466
            %v1387 = vadd.s32 %v1375, %v467
            %v1388 = vadd.s32 %v1375, %v468
            %v1389 = vadd.s32 %v1375, %v469
            %v1390 = vadd.s32 %v1375, %v470
            %v1391 = vadd.s32 %v1375, %v471
            %vm1392 = vcmp.lt.s32.totalorder %v1376, 256
            %vm1393 = vcmp.lt.s32.totalorder %v1377, 256
            %vm1394 = vcmp.lt.s32.totalorder %v1378, 256
            %vm1395 = vcmp.lt.s32.totalorder %v1379, 256
            %vm1396 = vcmp.lt.s32.totalorder %v1380, 256
            %vm1397 = vcmp.lt.s32.totalorder %v1381, 256
            %vm1398 = vcmp.lt.s32.totalorder %v1382, 256
            %vm1399 = vcmp.lt.s32.totalorder %v1383, 256
            %vm1400 = vcmp.lt.s32.totalorder %v1384, 256
            %vm1401 = vcmp.lt.s32.totalorder %v1385, 256
            %vm1402 = vcmp.lt.s32.totalorder %v1386, 256
            %vm1403 = vcmp.lt.s32.totalorder %v1387, 256
            %vm1404 = vcmp.lt.s32.totalorder %v1388, 256
            %vm1405 = vcmp.lt.s32.totalorder %v1389, 256
            %vm1406 = vcmp.lt.s32.totalorder %v1390, 256
            %vm1407 = vcmp.lt.s32.totalorder %v1391, 256
            %s1408 = scalar_lea.vmem [#allocation2], %s1374
            %v1409 = vld [vmem:[%s1408] sm:$0xff]
            %v1410 = vld [vmem:[%s1408 + $0x8] sm:$0xff]
            %v1411 = vld [vmem:[%s1408 + $0x10] sm:$0xff]
            %v1412 = vld [vmem:[%s1408 + $0x18] sm:$0xff]
            %v1413 = vld [vmem:[%s1408 + $0x20] sm:$0xff]
            %v1414 = vld [vmem:[%s1408 + $0x28] sm:$0xff]
            %v1415 = vld [vmem:[%s1408 + $0x30] sm:$0xff]
            %v1416 = vld [vmem:[%s1408 + $0x38] sm:$0xff]
            %v1417 = vld [vmem:[%s1408 + $0x40] sm:$0xff]
            %v1418 = vld [vmem:[%s1408 + $0x48] sm:$0xff]
            %v1419 = vld [vmem:[%s1408 + $0x50] sm:$0xff]
            %v1420 = vld [vmem:[%s1408 + $0x58] sm:$0xff]
            %v1421 = vld [vmem:[%s1408 + $0x60] sm:$0xff]
            %v1422 = vld [vmem:[%s1408 + $0x68] sm:$0xff]
            %v1423 = vld [vmem:[%s1408 + $0x70] sm:$0xff]
            %v1424 = vld [vmem:[%s1408 + $0x78] sm:$0xff]
            %v1426 = vperm.slane %v1366, 0
            %v1428 = vsub.f32 %v1409, %v1426
            %v1429 = vsub.f32 %v1410, %v1426
            %v1430 = vsub.f32 %v1411, %v1426
            %v1431 = vsub.f32 %v1412, %v1426
            %v1432 = vsub.f32 %v1413, %v1426
            %v1433 = vsub.f32 %v1414, %v1426
            %v1434 = vsub.f32 %v1415, %v1426
            %v1435 = vsub.f32 %v1416, %v1426
            %v1436 = vsub.f32 %v1417, %v1426
            %v1437 = vsub.f32 %v1418, %v1426
            %v1438 = vsub.f32 %v1419, %v1426
            %v1439 = vsub.f32 %v1420, %v1426
            %v1440 = vsub.f32 %v1421, %v1426
            %v1441 = vsub.f32 %v1422, %v1426
            %v1442 = vsub.f32 %v1423, %v1426
            %v1443 = vsub.f32 %v1424, %v1426
            %v1444 = vsel %vm1392, 1, 0
            %v1445 = vsel %vm1393, 1, 0
            %v1446 = vsel %vm1394, 1, 0
            %v1447 = vsel %vm1395, 1, 0
            %v1448 = vsel %vm1396, 1, 0
            %v1449 = vsel %vm1397, 1, 0
            %v1450 = vsel %vm1398, 1, 0
            %v1451 = vsel %vm1399, 1, 0
            %v1452 = vsel %vm1400, 1, 0
            %v1453 = vsel %vm1401, 1, 0
            %v1454 = vsel %vm1402, 1, 0
            %v1455 = vsel %vm1403, 1, 0
            %v1456 = vsel %vm1404, 1, 0
            %v1457 = vsel %vm1405, 1, 0
            %v1458 = vsel %vm1406, 1, 0
            %v1459 = vsel %vm1407, 1, 0
            %vm1460 = vcmp.eq.s32.totalorder %v1444, 1
            %vm1461 = vcmp.eq.s32.totalorder %v1445, 1
            %vm1462 = vcmp.eq.s32.totalorder %v1446, 1
            %vm1463 = vcmp.eq.s32.totalorder %v1447, 1
            %vm1464 = vcmp.eq.s32.totalorder %v1448, 1
            %vm1465 = vcmp.eq.s32.totalorder %v1449, 1
            %vm1466 = vcmp.eq.s32.totalorder %v1450, 1
            %vm1467 = vcmp.eq.s32.totalorder %v1451, 1
            %vm1468 = vcmp.eq.s32.totalorder %v1452, 1
            %vm1469 = vcmp.eq.s32.totalorder %v1453, 1
            %vm1470 = vcmp.eq.s32.totalorder %v1454, 1
            %vm1471 = vcmp.eq.s32.totalorder %v1455, 1
            %vm1472 = vcmp.eq.s32.totalorder %v1456, 1
            %vm1473 = vcmp.eq.s32.totalorder %v1457, 1
            %vm1474 = vcmp.eq.s32.totalorder %v1458, 1
            %vm1475 = vcmp.eq.s32.totalorder %v1459, 1
            %v1476 = vsel %vm1460, %v1428, 0.0
            %v1477 = vsel %vm1461, %v1429, 0.0
            %v1478 = vsel %vm1462, %v1430, 0.0
            %v1479 = vsel %vm1463, %v1431, 0.0
            %v1480 = vsel %vm1464, %v1432, 0.0
            %v1481 = vsel %vm1465, %v1433, 0.0
            %v1482 = vsel %vm1466, %v1434, 0.0
            %v1483 = vsel %vm1467, %v1435, 0.0
            %v1484 = vsel %vm1468, %v1436, 0.0
            %v1485 = vsel %vm1469, %v1437, 0.0
            %v1486 = vsel %vm1470, %v1438, 0.0
            %v1487 = vsel %vm1471, %v1439, 0.0
            %v1488 = vsel %vm1472, %v1440, 0.0
            %v1489 = vsel %vm1473, %v1441, 0.0
            %v1490 = vsel %vm1474, %v1442, 0.0
            %v1491 = vsel %vm1475, %v1443, 0.0
            %v1492 = vld [vmem:[#allocation5] sm:$0x1]
            %v1493 = vmul.f32 %v1476, %v1476
            %v1494 = vmul.f32 %v1477, %v1477
            %v1495 = vmul.f32 %v1478, %v1478
            %v1496 = vmul.f32 %v1479, %v1479
            %v1497 = vmul.f32 %v1480, %v1480
            %v1498 = vmul.f32 %v1481, %v1481
            %v1499 = vmul.f32 %v1482, %v1482
            %v1500 = vmul.f32 %v1483, %v1483
            %v1501 = vmul.f32 %v1484, %v1484
            %v1502 = vmul.f32 %v1485, %v1485
            %v1503 = vmul.f32 %v1486, %v1486
            %v1504 = vmul.f32 %v1487, %v1487
            %v1505 = vmul.f32 %v1488, %v1488
            %v1506 = vmul.f32 %v1489, %v1489
            %v1507 = vmul.f32 %v1490, %v1490
            %v1508 = vmul.f32 %v1491, %v1491
            %v1509 = vadd.f32 %v1493, %v1494
            %v1510 = vadd.f32 %v1509, %v1495
            %v1511 = vadd.f32 %v1510, %v1496
            %v1512 = vadd.f32 %v1511, %v1497
            %v1513 = vadd.f32 %v1512, %v1498
            %v1514 = vadd.f32 %v1513, %v1499
            %v1515 = vadd.f32 %v1514, %v1500
            %v1516 = vadd.f32 %v1515, %v1501
            %v1517 = vadd.f32 %v1516, %v1502
            %v1518 = vadd.f32 %v1517, %v1503
            %v1519 = vadd.f32 %v1518, %v1504
            %v1520 = vadd.f32 %v1519, %v1505
            %v1521 = vadd.f32 %v1520, %v1506
            %v1522 = vadd.f32 %v1521, %v1507
            %v1523 = vadd.f32 %v1522, %v1508
            %v1524 = vrot.slane %v1523, 4
            %v1525 = vadd.f32 %v1523, %v1524
            %v1526 = vrot.slane %v1525, 2
            %v1527 = vadd.f32 %v1525, %v1526
            %v1528 = vrot.slane %v1527, 1
            %v1529 = vadd.f32 %v1527, %v1528
            %v1530 = vadd.f32 %v1492, %v1529
            %1531 = vst [vmem:[#allocation5] sm:$0x1] %v1530
          $region89: #{tpu_custom_call.1} parent=83 // loop_footer
            %s1373 = sadd.s32 1, %s1369
          $region90: #{tpu_custom_call.1} parent=83 // loop_footer_branch
            %1368 = sbr.rel target = $region86
          $region91: #{tpu_custom_call.1} parent=83 // loop_exit
            _
          %v1532 = vld [vmem:[#allocation5] sm:$0x1]
          %v1533 = vmul.f32 %v1532, 0.00390625
          %v1534 = vadd.f32 %v1533, 1e-05
          %v1535 = vrsqrt.pop %v1534
          %v1536 = vmul.f32 %v1535, %v1534
          %v1537 = vmul.f32 %v1536, %v1535
          %v1538 = vmul.f32 0.5, %v1537
          %v1539 = vsub.f32 1.5, %v1538
          %v1540 = vmul.f32 %v1535, %v1539
          %vm1541 = vweird.f32 %v1534
          %vm1542 = vweird.f32 %v1535
          %vm1543 = vmor %vm1541, %vm1542
          %v1544 = vsel %vm1543, %v1535, %v1540
          loop: start=0, step=1, limit=2
          $region92: #{tpu_custom_call.1} parent=83 // loop_pre_header
            _
          $region93: #{tpu_custom_call.1} parent=83 // loop_header
            %s1546 = sphi 0, %s1550
            %p1547 = scmp.ge.s32.totalorder %s1546, 2
          $region94: #{tpu_custom_call.1} parent=83 // loop_header_branch
            %1549 = sbr.rel (%p1547) target = $region98
          $region95: #{tpu_custom_call.1} parent=83 // loop_body
            %s1551 = smul.u32 %s1546, 128
            %v1552 = vstv %s1551
            %v1553 = vadd.s32 %v1552, %v456
            %v1554 = vadd.s32 %v1552, %v457
            %v1555 = vadd.s32 %v1552, %v458
            %v1556 = vadd.s32 %v1552, %v459
            %v1557 = vadd.s32 %v1552, %v460
            %v1558 = vadd.s32 %v1552, %v461
            %v1559 = vadd.s32 %v1552, %v462
            %v1560 = vadd.s32 %v1552, %v463
            %v1561 = vadd.s32 %v1552, %v464
            %v1562 = vadd.s32 %v1552, %v465
            %v1563 = vadd.s32 %v1552, %v466
            %v1564 = vadd.s32 %v1552, %v467
            %v1565 = vadd.s32 %v1552, %v468
            %v1566 = vadd.s32 %v1552, %v469
            %v1567 = vadd.s32 %v1552, %v470
            %v1568 = vadd.s32 %v1552, %v471
            %s1569 = scalar_lea.vmem [#allocation2], %s1551
            %v1570 = vld [vmem:[%s1569] sm:$0xff]
            %v1571 = vld [vmem:[%s1569 + $0x8] sm:$0xff]
            %v1572 = vld [vmem:[%s1569 + $0x10] sm:$0xff]
            %v1573 = vld [vmem:[%s1569 + $0x18] sm:$0xff]
            %v1574 = vld [vmem:[%s1569 + $0x20] sm:$0xff]
            %v1575 = vld [vmem:[%s1569 + $0x28] sm:$0xff]
            %v1576 = vld [vmem:[%s1569 + $0x30] sm:$0xff]
            %v1577 = vld [vmem:[%s1569 + $0x38] sm:$0xff]
            %v1578 = vld [vmem:[%s1569 + $0x40] sm:$0xff]
            %v1579 = vld [vmem:[%s1569 + $0x48] sm:$0xff]
            %v1580 = vld [vmem:[%s1569 + $0x50] sm:$0xff]
            %v1581 = vld [vmem:[%s1569 + $0x58] sm:$0xff]
            %v1582 = vld [vmem:[%s1569 + $0x60] sm:$0xff]
            %v1583 = vld [vmem:[%s1569 + $0x68] sm:$0xff]
            %v1584 = vld [vmem:[%s1569 + $0x70] sm:$0xff]
            %v1585 = vld [vmem:[%s1569 + $0x78] sm:$0xff]
            %v1587 = vperm.slane %v1366, 0
            %v1589 = vsub.f32 %v1570, %v1587
            %v1590 = vsub.f32 %v1571, %v1587
            %v1591 = vsub.f32 %v1572, %v1587
            %v1592 = vsub.f32 %v1573, %v1587
            %v1593 = vsub.f32 %v1574, %v1587
            %v1594 = vsub.f32 %v1575, %v1587
            %v1595 = vsub.f32 %v1576, %v1587
            %v1596 = vsub.f32 %v1577, %v1587
            %v1597 = vsub.f32 %v1578, %v1587
            %v1598 = vsub.f32 %v1579, %v1587
            %v1599 = vsub.f32 %v1580, %v1587
            %v1600 = vsub.f32 %v1581, %v1587
            %v1601 = vsub.f32 %v1582, %v1587
            %v1602 = vsub.f32 %v1583, %v1587
            %v1603 = vsub.f32 %v1584, %v1587
            %v1604 = vsub.f32 %v1585, %v1587
            %v1606 = vperm.slane %v1544, 0
            %v1608 = vmul.f32 %v1589, %v1606
            %v1609 = vmul.f32 %v1590, %v1606
            %v1610 = vmul.f32 %v1591, %v1606
            %v1611 = vmul.f32 %v1592, %v1606
            %v1612 = vmul.f32 %v1593, %v1606
            %v1613 = vmul.f32 %v1594, %v1606
            %v1614 = vmul.f32 %v1595, %v1606
            %v1615 = vmul.f32 %v1596, %v1606
            %v1616 = vmul.f32 %v1597, %v1606
            %v1617 = vmul.f32 %v1598, %v1606
            %v1618 = vmul.f32 %v1599, %v1606
            %v1619 = vmul.f32 %v1600, %v1606
            %v1620 = vmul.f32 %v1601, %v1606
            %v1621 = vmul.f32 %v1602, %v1606
            %v1622 = vmul.f32 %v1603, %v1606
            %v1623 = vmul.f32 %v1604, %v1606
            %v1624 = vmax.f32 %v1608, 0.0
            %v1625 = vmax.f32 %v1609, 0.0
            %v1626 = vmax.f32 %v1610, 0.0
            %v1627 = vmax.f32 %v1611, 0.0
            %v1628 = vmax.f32 %v1612, 0.0
            %v1629 = vmax.f32 %v1613, 0.0
            %v1630 = vmax.f32 %v1614, 0.0
            %v1631 = vmax.f32 %v1615, 0.0
            %v1632 = vmax.f32 %v1616, 0.0
            %v1633 = vmax.f32 %v1617, 0.0
            %v1634 = vmax.f32 %v1618, 0.0
            %v1635 = vmax.f32 %v1619, 0.0
            %v1636 = vmax.f32 %v1620, 0.0
            %v1637 = vmax.f32 %v1621, 0.0
            %v1638 = vmax.f32 %v1622, 0.0
            %v1639 = vmax.f32 %v1623, 0.0
            %vm1640 = vcmp.lt.s32.totalorder %v1553, 256
            %vm1641 = vcmp.lt.s32.totalorder %v1554, 256
            %vm1642 = vcmp.lt.s32.totalorder %v1555, 256
            %vm1643 = vcmp.lt.s32.totalorder %v1556, 256
            %vm1644 = vcmp.lt.s32.totalorder %v1557, 256
            %vm1645 = vcmp.lt.s32.totalorder %v1558, 256
            %vm1646 = vcmp.lt.s32.totalorder %v1559, 256
            %vm1647 = vcmp.lt.s32.totalorder %v1560, 256
            %vm1648 = vcmp.lt.s32.totalorder %v1561, 256
            %vm1649 = vcmp.lt.s32.totalorder %v1562, 256
            %vm1650 = vcmp.lt.s32.totalorder %v1563, 256
            %vm1651 = vcmp.lt.s32.totalorder %v1564, 256
            %vm1652 = vcmp.lt.s32.totalorder %v1565, 256
            %vm1653 = vcmp.lt.s32.totalorder %v1566, 256
            %vm1654 = vcmp.lt.s32.totalorder %v1567, 256
            %vm1655 = vcmp.lt.s32.totalorder %v1568, 256
            %v1656 = vsel %vm1640, 1, 0
            %v1657 = vsel %vm1641, 1, 0
            %v1658 = vsel %vm1642, 1, 0
            %v1659 = vsel %vm1643, 1, 0
            %v1660 = vsel %vm1644, 1, 0
            %v1661 = vsel %vm1645, 1, 0
            %v1662 = vsel %vm1646, 1, 0
            %v1663 = vsel %vm1647, 1, 0
            %v1664 = vsel %vm1648, 1, 0
            %v1665 = vsel %vm1649, 1, 0
            %v1666 = vsel %vm1650, 1, 0
            %v1667 = vsel %vm1651, 1, 0
            %v1668 = vsel %vm1652, 1, 0
            %v1669 = vsel %vm1653, 1, 0
            %v1670 = vsel %vm1654, 1, 0
            %v1671 = vsel %vm1655, 1, 0
            %vm1672 = vcmp.eq.s32.totalorder %v1656, 1
            %vm1673 = vcmp.eq.s32.totalorder %v1657, 1
            %vm1674 = vcmp.eq.s32.totalorder %v1658, 1
            %vm1675 = vcmp.eq.s32.totalorder %v1659, 1
            %vm1676 = vcmp.eq.s32.totalorder %v1660, 1
            %vm1677 = vcmp.eq.s32.totalorder %v1661, 1
            %vm1678 = vcmp.eq.s32.totalorder %v1662, 1
            %vm1679 = vcmp.eq.s32.totalorder %v1663, 1
            %vm1680 = vcmp.eq.s32.totalorder %v1664, 1
            %vm1681 = vcmp.eq.s32.totalorder %v1665, 1
            %vm1682 = vcmp.eq.s32.totalorder %v1666, 1
            %vm1683 = vcmp.eq.s32.totalorder %v1667, 1
            %vm1684 = vcmp.eq.s32.totalorder %v1668, 1
            %vm1685 = vcmp.eq.s32.totalorder %v1669, 1
            %vm1686 = vcmp.eq.s32.totalorder %v1670, 1
            %vm1687 = vcmp.eq.s32.totalorder %v1671, 1
            %v1688 = vsel %vm1672, %v1624, 0.0
            %v1689 = vsel %vm1673, %v1625, 0.0
            %v1690 = vsel %vm1674, %v1626, 0.0
            %v1691 = vsel %vm1675, %v1627, 0.0
            %v1692 = vsel %vm1676, %v1628, 0.0
            %v1693 = vsel %vm1677, %v1629, 0.0
            %v1694 = vsel %vm1678, %v1630, 0.0
            %v1695 = vsel %vm1679, %v1631, 0.0
            %v1696 = vsel %vm1680, %v1632, 0.0
            %v1697 = vsel %vm1681, %v1633, 0.0
            %v1698 = vsel %vm1682, %v1634, 0.0
            %v1699 = vsel %vm1683, %v1635, 0.0
            %v1700 = vsel %vm1684, %v1636, 0.0
            %v1701 = vsel %vm1685, %v1637, 0.0
            %v1702 = vsel %vm1686, %v1638, 0.0
            %v1703 = vsel %vm1687, %v1639, 0.0
            %1704 = vst [vmem:[%s1569] sm:$0xff] %v1688
            %1705 = vst [vmem:[%s1569 + $0x8] sm:$0xff] %v1689
            %1706 = vst [vmem:[%s1569 + $0x10] sm:$0xff] %v1690
            %1707 = vst [vmem:[%s1569 + $0x18] sm:$0xff] %v1691
            %1708 = vst [vmem:[%s1569 + $0x20] sm:$0xff] %v1692
            %1709 = vst [vmem:[%s1569 + $0x28] sm:$0xff] %v1693
            %1710 = vst [vmem:[%s1569 + $0x30] sm:$0xff] %v1694
            %1711 = vst [vmem:[%s1569 + $0x38] sm:$0xff] %v1695
            %1712 = vst [vmem:[%s1569 + $0x40] sm:$0xff] %v1696
            %1713 = vst [vmem:[%s1569 + $0x48] sm:$0xff] %v1697
            %1714 = vst [vmem:[%s1569 + $0x50] sm:$0xff] %v1698
            %1715 = vst [vmem:[%s1569 + $0x58] sm:$0xff] %v1699
            %1716 = vst [vmem:[%s1569 + $0x60] sm:$0xff] %v1700
            %1717 = vst [vmem:[%s1569 + $0x68] sm:$0xff] %v1701
            %1718 = vst [vmem:[%s1569 + $0x70] sm:$0xff] %v1702
            %1719 = vst [vmem:[%s1569 + $0x78] sm:$0xff] %v1703
            %v1720 = vpack.c.bf16 %v1688, %v1688
            %v1721 = vpack.c.bf16 %v1689, %v1689
            %v1722 = vpack.c.bf16 %v1690, %v1690
            %v1723 = vpack.c.bf16 %v1691, %v1691
            %v1724 = vpack.c.bf16 %v1692, %v1692
            %v1725 = vpack.c.bf16 %v1693, %v1693
            %v1726 = vpack.c.bf16 %v1694, %v1694
            %v1727 = vpack.c.bf16 %v1695, %v1695
            %v1728 = vpack.c.bf16 %v1696, %v1696
            %v1729 = vpack.c.bf16 %v1697, %v1697
            %v1730 = vpack.c.bf16 %v1698, %v1698
            %v1731 = vpack.c.bf16 %v1699, %v1699
            %v1732 = vpack.c.bf16 %v1700, %v1700
            %v1733 = vpack.c.bf16 %v1701, %v1701
            %v1734 = vpack.c.bf16 %v1702, %v1702
            %v1735 = vpack.c.bf16 %v1703, %v1703
            %s1736 = sshra.s32 %s1551, 3
            %s1737 = sand.u32 %s1551, 7
            %s1738 = smul.addr %s1736, 4
            %s1739 = scalar_lea.vmem [#allocation3], %s1738
            %1740 = vst [vmem:[%s1739] sm:$0xf] %v1720
            %1741 = vst [vmem:[%s1739 + $0x4] sm:$0xf] %v1721
            %1742 = vst [vmem:[%s1739 + $0x8] sm:$0xf] %v1722
            %1743 = vst [vmem:[%s1739 + $0xc] sm:$0xf] %v1723
            %1744 = vst [vmem:[%s1739 + $0x10] sm:$0xf] %v1724
            %1745 = vst [vmem:[%s1739 + $0x14] sm:$0xf] %v1725
            %1746 = vst [vmem:[%s1739 + $0x18] sm:$0xf] %v1726
            %1747 = vst [vmem:[%s1739 + $0x1c] sm:$0xf] %v1727
            %1748 = vst [vmem:[%s1739 + $0x20] sm:$0xf] %v1728
            %1749 = vst [vmem:[%s1739 + $0x24] sm:$0xf] %v1729
            %1750 = vst [vmem:[%s1739 + $0x28] sm:$0xf] %v1730
            %1751 = vst [vmem:[%s1739 + $0x2c] sm:$0xf] %v1731
            %1752 = vst [vmem:[%s1739 + $0x30] sm:$0xf] %v1732
            %1753 = vst [vmem:[%s1739 + $0x34] sm:$0xf] %v1733
            %1754 = vst [vmem:[%s1739 + $0x38] sm:$0xf] %v1734
            %1755 = vst [vmem:[%s1739 + $0x3c] sm:$0xf] %v1735
          $region96: #{tpu_custom_call.1} parent=83 // loop_footer
            %s1550 = sadd.s32 1, %s1546
          $region97: #{tpu_custom_call.1} parent=83 // loop_footer_branch
            %1545 = sbr.rel target = $region93
          $region98: #{tpu_custom_call.1} parent=83 // loop_exit
            _
          %v1756 = vld [vmem:[#allocation11] sm:$0xff]
          %v1757 = vld [vmem:[#allocation3] sm:$0xf]
          %v1758 = vld [vmem:[#allocation3 + $0x4] sm:$0xf]
          %v1759 = vld [vmem:[#allocation3 + $0x8] sm:$0xf]
          %v1760 = vld [vmem:[#allocation3 + $0xc] sm:$0xf]
          %v1761 = vld [vmem:[#allocation3 + $0x10] sm:$0xf]
          %v1762 = vld [vmem:[#allocation3 + $0x14] sm:$0xf]
          %v1763 = vld [vmem:[#allocation3 + $0x18] sm:$0xf]
          %v1764 = vld [vmem:[#allocation3 + $0x1c] sm:$0xf]
          %v1765 = vld [vmem:[#allocation3 + $0x20] sm:$0xf]
          %v1766 = vld [vmem:[#allocation3 + $0x24] sm:$0xf]
          %v1767 = vld [vmem:[#allocation3 + $0x28] sm:$0xf]
          %v1768 = vld [vmem:[#allocation3 + $0x2c] sm:$0xf]
          %v1769 = vld [vmem:[#allocation3 + $0x30] sm:$0xf]
          %v1770 = vld [vmem:[#allocation3 + $0x34] sm:$0xf]
          %v1771 = vld [vmem:[#allocation3 + $0x38] sm:$0xf]
          %v1772 = vld [vmem:[#allocation3 + $0x3c] sm:$0xf]
          %v1773 = vld [vmem:[#allocation3 + $0x40] sm:$0xf]
          %v1774 = vld [vmem:[#allocation3 + $0x44] sm:$0xf]
          %v1775 = vld [vmem:[#allocation3 + $0x48] sm:$0xf]
          %v1776 = vld [vmem:[#allocation3 + $0x4c] sm:$0xf]
          %v1777 = vld [vmem:[#allocation3 + $0x50] sm:$0xf]
          %v1778 = vld [vmem:[#allocation3 + $0x54] sm:$0xf]
          %v1779 = vld [vmem:[#allocation3 + $0x58] sm:$0xf]
          %v1780 = vld [vmem:[#allocation3 + $0x5c] sm:$0xf]
          %v1781 = vld [vmem:[#allocation3 + $0x60] sm:$0xf]
          %v1782 = vld [vmem:[#allocation3 + $0x64] sm:$0xf]
          %v1783 = vld [vmem:[#allocation3 + $0x68] sm:$0xf]
          %v1784 = vld [vmem:[#allocation3 + $0x6c] sm:$0xf]
          %v1785 = vld [vmem:[#allocation3 + $0x70] sm:$0xf]
          %v1786 = vld [vmem:[#allocation3 + $0x74] sm:$0xf]
          %v1787 = vld [vmem:[#allocation3 + $0x78] sm:$0xf]
          %v1788 = vld [vmem:[#allocation3 + $0x7c] sm:$0xf]
          %v1790 = vunpack.c.l.b16 %v1756
          %v1791 = vunpack.c.h.b16 %v1756
          %v1792 = vpack.c.b16 %v1790, %v1790
          %v1793 = vpack.c.b16 %v1791, %v1791
          %v1828 = vunpack.c.l.b16 %v1757
          %v1829 = vunpack.c.l.b16 %v1758
          %v1830 = vunpack.c.l.b16 %v1759
          %v1831 = vunpack.c.l.b16 %v1760
          %v1832 = vunpack.c.l.b16 %v1761
          %v1833 = vunpack.c.l.b16 %v1762
          %v1834 = vunpack.c.l.b16 %v1763
          %v1835 = vunpack.c.l.b16 %v1764
          %v1836 = vunpack.c.l.b16 %v1765
          %v1837 = vunpack.c.l.b16 %v1766
          %v1838 = vunpack.c.l.b16 %v1767
          %v1839 = vunpack.c.l.b16 %v1768
          %v1840 = vunpack.c.l.b16 %v1769
          %v1841 = vunpack.c.l.b16 %v1770
          %v1842 = vunpack.c.l.b16 %v1771
          %v1843 = vunpack.c.l.b16 %v1772
          %v1844 = vunpack.c.l.b16 %v1773
          %v1845 = vunpack.c.l.b16 %v1774
          %v1846 = vunpack.c.l.b16 %v1775
          %v1847 = vunpack.c.l.b16 %v1776
          %v1848 = vunpack.c.l.b16 %v1777
          %v1849 = vunpack.c.l.b16 %v1778
          %v1850 = vunpack.c.l.b16 %v1779
          %v1851 = vunpack.c.l.b16 %v1780
          %v1852 = vunpack.c.l.b16 %v1781
          %v1853 = vunpack.c.l.b16 %v1782
          %v1854 = vunpack.c.l.b16 %v1783
          %v1855 = vunpack.c.l.b16 %v1784
          %v1856 = vunpack.c.l.b16 %v1785
          %v1857 = vunpack.c.l.b16 %v1786
          %v1858 = vunpack.c.l.b16 %v1787
          %v1859 = vunpack.c.l.b16 %v1788
          %v1860 = vpack.c.b16 %v1829, %v1828
          %v1861 = vpack.c.b16 %v1831, %v1830
          %v1862 = vpack.c.b16 %v1833, %v1832
          %v1863 = vpack.c.b16 %v1835, %v1834
          %v1864 = vpack.c.b16 %v1837, %v1836
          %v1865 = vpack.c.b16 %v1839, %v1838
          %v1866 = vpack.c.b16 %v1841, %v1840
          %v1867 = vpack.c.b16 %v1843, %v1842
          %v1868 = vpack.c.b16 %v1845, %v1844
          %v1869 = vpack.c.b16 %v1847, %v1846
          %v1870 = vpack.c.b16 %v1849, %v1848
          %v1871 = vpack.c.b16 %v1851, %v1850
          %v1872 = vpack.c.b16 %v1853, %v1852
          %v1873 = vpack.c.b16 %v1855, %v1854
          %v1874 = vpack.c.b16 %v1857, %v1856
          %v1875 = vpack.c.b16 %v1859, %v1858
          %1892 = vmatpush.bf16.msra.mxu0 %v1867
          %1893 = vmatpush.bf16.msra.mxu0 %v1866
          %1894 = vmatpush.bf16.msra.mxu0 %v1865
          %1895 = vmatpush.bf16.msra.mxu0 %v1864
          %1896 = vmatpush.bf16.msra.mxu0 %v1863
          %1897 = vmatpush.bf16.msra.mxu0 %v1862
          %1898 = vmatpush.bf16.msra.mxu0 %v1861
          %1899 = vmatpush.bf16.msra.mxu0 %v1860
          %1900 = vmatmul.bf16.gmra.mxu0 %v1792
          %v1901 = vpop.f32.mrf.mxu0
          %v1902 = vadd.f32 0.0, %v1901
          %v1903 = vpop.f32.mrf.mxu0
          %1904 = vdwg.mxu0
          %1905 = vmatpush.bf16.msra.mxu0 %v1875
          %1906 = vmatpush.bf16.msra.mxu0 %v1874
          %1907 = vmatpush.bf16.msra.mxu0 %v1873
          %1908 = vmatpush.bf16.msra.mxu0 %v1872
          %1909 = vmatpush.bf16.msra.mxu0 %v1871
          %1910 = vmatpush.bf16.msra.mxu0 %v1870
          %1911 = vmatpush.bf16.msra.mxu0 %v1869
          %1912 = vmatpush.bf16.msra.mxu0 %v1868
          %1913 = vmatmul.bf16.gmra.mxu0 %v1793
          %v1914 = vpop.f32.mrf.mxu0
          %v1915 = vadd.f32 %v1902, %v1914
          %v1916 = vpop.f32.mrf.mxu0
          %1917 = vdwg.mxu0
          %1918 = vst [vmem:[%s438] sm:$0xff] %v1915
        $region84: #{tpu_custom_call.1} parent=47 // pred_fallthru
          _
        %s1919 = sand.u32 %s224, 1
        %s1920 = scalar_lea.sflag [#allocation8], %s1919
        %s1921 = sand.u32 %s224, 1
        %s1922 = smul.addr %s1921, 8
        %s1923 = scalar_lea.vmem [#allocation15], %s1922
        // Predicated region
        $region99: #{tpu_custom_call.1} parent=47 // pred_check
          %p1924 = pneg %p234
        $region100: #{tpu_custom_call.1} parent=47 // pred_check_branch
          %1926 = sbr.rel (%p1924) target = $region102
        $region101: #{tpu_custom_call.1} parent=47 // pred_region
          %1928 = vsyncadd %s1920, 0
          %s1929 = smul.addr %s30, 8
          %s1930 = scalar_lea.hbm %s7, %s1929
          %s1932 = sshll.u32 %s1923, 4
          %s1933 = int_to_ptr.vmem [resolvable:$true] %s1932
          %s1934 = sshll.u32 %s1930, 4
          %s1935 = int_to_ptr.hbm [resolvable:$true] %s1934
          %1937 = dma.vmem_to_hbm [thread:$0]  %s1933, 128, %s1935, %s1920
        $region102: #{tpu_custom_call.1} parent=47 // pred_fallthru
          _
      $region48: #{tpu_custom_call.1} parent=5 // pred_fallthru
        _
      %p1938 = scmp.le.s32.totalorder 2, %s21
      // Predicated region
      $region103: #{tpu_custom_call.1} parent=5 // pred_check
        %p1939 = pneg %p1938
      $region104: #{tpu_custom_call.1} parent=5 // pred_check_branch
        %1941 = sbr.rel (%p1939) target = $region106
      $region105: #{tpu_custom_call.1} parent=5 // pred_region
        %s1942 = ssub.s32 %s21, 2
        // Predicated region
        $region107: #{tpu_custom_call.1} parent=105 // pred_check
          %p1943 = pneg %p240
        $region108: #{tpu_custom_call.1} parent=105 // pred_check_branch
          %1945 = sbr.rel (%p1943) target = $region110
        $region109: #{tpu_custom_call.1} parent=105 // pred_region
          %s1946 = sand.u32 %s225, 1
          %s1947 = scalar_lea.sflag [#allocation8], %s1946
          %s1948 = sand.u32 %s225, 1
          %s1949 = smul.addr %s1948, 8
          %s1950 = scalar_lea.vmem [#allocation15], %s1949
          %1952 = dma.done %s1947, 128
        $region110: #{tpu_custom_call.1} parent=105 // pred_fallthru
          _
      $region106: #{tpu_custom_call.1} parent=5 // pred_fallthru
        _
    $region6: #{tpu_custom_call.1} parent=1 // loop_footer
      %s25 = sadd.s32 1, %s21
    $region7: #{tpu_custom_call.1} parent=1 // loop_footer_branch
      %20 = sbr.rel target = $region3
    $region8: #{tpu_custom_call.1} parent=1 // loop_exit
      _
    %1953 = vsyncpa [#allocation7], 1
    %s1954 = scalar_lea.sflag [#allocation7], 1
    %1955 = vsyncpa %s1954, 1
    %1956 = vsyncpa [#allocation10], 1
    %1957 = vsyncpa [#allocation13], 1
    %1958 = vsyncpa [#allocation8], 1
    %s1959 = scalar_lea.sflag [#allocation8], 1
    %1960 = vsyncpa %s1959, 1

</llo_original>
